<compile_context>
chip_gen: v7x
topology: tpu7x:2x2x1
jax: 0.10.0
libtpu: 0.0.40
codegen_flags: <defaults>
</compile_context>

<pallas_src>
import jax
import jax.numpy as jnp
from jax import lax
from jax.experimental import pallas as pl
from jax.experimental.pallas import tpu as pltpu
import numpy as np

PAD = 6            # self.pad = 6 in the PyTorch module
LN_EPS = 1e-5
C_PAD = 128        # classifier columns padded to one full lane width


def _gelu(x):
    # tanh-approx GELU. TODO(synk): HF-style BERT/RNA-FM uses exact erf GELU.
    c = jnp.asarray(np.sqrt(2.0 / np.pi), x.dtype)
    return 0.5 * x * (1.0 + jnp.tanh(c * (x + 0.044715 * x * x * x)))


def _layernorm(x, g, b):
    mu = jnp.mean(x, axis=-1, keepdims=True)
    var = jnp.mean((x - mu) ** 2, axis=-1, keepdims=True)
    return (x - mu) * lax.rsqrt(var + LN_EPS) * g + b


def rnafm_token_cls_kernel(ids_ref, embed_ref, whin_ref, w2_ref, vecs_ref,
                           bias_ref, out_ref):
    """Whole batch in one grid step, rows flattened to (N, H) with N = B*L."""
    f32, bf16 = jnp.float32, jnp.bfloat16
    V, H = embed_ref.shape
    F = w2_ref.shape[0]
    N = ids_ref.shape[0]

    # ---- fused embedding gather: one-hot (N, V) @ table (V, H) on the MXU ----
    ids = ids_ref[...]                                           # (N, 1) int32
    col = lax.broadcasted_iota(jnp.int32, (N, V), 1)
    onehot = (ids == col).astype(f32)
    x = jnp.dot(onehot, embed_ref[...], preferred_element_type=f32)   # (N, H) f32

    whin = whin_ref[...]                   # (H, 4H + C_PAD + F) bf16, packed
    OFF_O, OFF_WC, OFF_W1 = 3 * H, 4 * H, 4 * H + C_PAD

    # ---- single-head self-attention over flattened rows (block-diag bias) ----
    qkv = jnp.dot(x.astype(bf16), whin[:, 0:3 * H],
                  preferred_element_type=f32)                    # (N, 3H)
    q, k, v = qkv[:, 0:H], qkv[:, H:2 * H], qkv[:, 2 * H:3 * H]  # Wq pre-scaled
    s = lax.dot_general(q.astype(bf16), k.astype(bf16),
                        (((1,), (1,)), ((), ())),
                        preferred_element_type=f32)              # (N, N)
    s = s + bias_ref[...]                                        # -1e30 off-block
    s = s - jnp.max(s, axis=-1, keepdims=True)
    p = jnp.exp(s)
    p = p * pl.reciprocal(jnp.sum(p, axis=-1, keepdims=True), approx=True)
    attn = jnp.dot(p.astype(bf16), v.astype(bf16), preferred_element_type=f32)
    h = x + jnp.dot(attn.astype(bf16), whin[:, OFF_O:OFF_O + H],
                    preferred_element_type=f32)
    h = _layernorm(h, vecs_ref[2:3, 0:H], vecs_ref[3:4, 0:H])

    # ---- GELU FFN ----
    f = _gelu(jnp.dot(h.astype(bf16), whin[:, OFF_W1:OFF_W1 + F],
                      preferred_element_type=f32) + vecs_ref[0:1, 0:F])
    f = jnp.dot(f.astype(bf16), w2_ref[...], preferred_element_type=f32) \
        + vecs_ref[1:2, 0:H]
    h = _layernorm(h + f, vecs_ref[4:5, 0:H], vecs_ref[5:6, 0:H])   # "repr[12]"

    # ---- classifier (columns padded to 128 lanes -> lane-dense store) ----
    logits = jnp.dot(h.astype(bf16), whin[:, OFF_WC:OFF_WC + C_PAD],
                     preferred_element_type=f32) + vecs_ref[6:7, :]
    out_ref[...] = logits.astype(out_ref.dtype)                  # (N, 128)


def rnafm_for_token_cls(input_ids, params):
    """input_ids: (B, L) int32 -> logits (B, num_labels, L - 1 - 2*PAD)."""
    B, L = input_ids.shape
    V, H = params["embed"].shape
    F = params["w2"].shape[0]
    C = params["wc"].shape[1]
    N = B * L
    L_cls = L - 1 - 2 * PAD

    # ---- pack 15 tiny params into 3 arrays (fewer DMA descriptors) ----
    wc_pad = jnp.zeros((H, C_PAD), jnp.float32).at[:, :C].set(params["wc"])
    whin = jnp.concatenate(
        [params["wq"] * jnp.float32(1.0 / np.sqrt(H)),    # fold softmax scale
         params["wk"], params["wv"], params["wo"], wc_pad, params["w1"]],
        axis=1).astype(jnp.bfloat16)                      # (H, 4H + 128 + F)
    w2 = params["w2"].astype(jnp.bfloat16)                # (F, H)

    def _row(v):
        v = jnp.ravel(v).astype(jnp.float32)
        return jnp.pad(v, (0, C_PAD - v.shape[0]))
    vecs = jnp.stack([_row(params["b1"]), _row(params["b2"]),
                      _row(params["ln1g"]), _row(params["ln1b"]),
                      _row(params["ln2g"]), _row(params["ln2b"]),
                      _row(params["bc"]),
                      jnp.zeros((C_PAD,), jnp.float32)], axis=0)   # (8, 128)

    ids2d = input_ids.reshape(N, 1).astype(jnp.int32)
    # block-diagonal additive attention bias: tokens attend within their own seq
    bid = jnp.arange(N, dtype=jnp.int32) // L
    bias = jnp.where(bid[:, None] == bid[None, :], 0.0, -1e30).astype(jnp.float32)

    def full(shape):
        return pl.BlockSpec(tuple(shape), lambda i, _n=len(shape): (0,) * _n)

    fn = pl.pallas_call(
        rnafm_token_cls_kernel,
        out_shape=jax.ShapeDtypeStruct((N, C_PAD), jnp.float32),
        grid_spec=pltpu.PrefetchScalarGridSpec(
            num_scalar_prefetch=0,
            grid=(1,),                       # whole (tiny) batch per step
            in_specs=[full((N, 1)), full((V, H)), full(whin.shape),
                      full(w2.shape), full(vecs.shape), full((N, N))],
            out_specs=full((N, C_PAD)),
        ),
        compiler_params=pltpu.CompilerParams(
            dimension_semantics=("arbitrary",)),
    )
    out = fn(ids2d, params["embed"].astype(jnp.float32), whin, w2, vecs, bias)

    # slice + transpose(1, 2) as wrapper-side layout plumbing (free)
    logits = out.reshape(B, L, C_PAD)[:, 1 + PAD: L - PAD, :C]
    return jnp.swapaxes(logits, 1, 2)                     # (B, C, L_cls == L-1-2*PAD)


def reference(input_ids, params):
    """Plain-JAX f32 reference of the same forward pass."""
    x = jnp.take(params["embed"], input_ids, axis=0).astype(jnp.float32)  # (B, L, H)
    H = x.shape[-1]
    q = x @ params["wq"]
    k = x @ params["wk"]
    v = x @ params["wv"]
    s = (q @ jnp.swapaxes(k, -1, -2)) / jnp.sqrt(jnp.float32(H))
    p = jax.nn.softmax(s, axis=-1)
    h = x + (p @ v) @ params["wo"]
    h = _layernorm(h, params["ln1g"], params["ln1b"])
    f = _gelu(h @ params["w1"] + params["b1"]) @ params["w2"] + params["b2"]
    h = _layernorm(h + f, params["ln2g"], params["ln2b"])
    logits = h @ params["wc"] + params["bc"]                              # (B, L, C)
    return jnp.swapaxes(logits[:, 1 + PAD:-PAD, :], 1, 2)                 # (B, C, L_cls)


def init_params(key, vocab=25, hidden=32, ffn=64, num_labels=3):
    ks = jax.random.split(key, 10)
    sc = 0.05
    return {
        "embed": sc * jax.random.normal(ks[0], (vocab, hidden), jnp.float32),
        "wq": sc * jax.random.normal(ks[1], (hidden, hidden), jnp.float32),
        "wk": sc * jax.random.normal(ks[2], (hidden, hidden), jnp.float32),
        "wv": sc * jax.random.normal(ks[3], (hidden, hidden), jnp.float32),
        "wo": sc * jax.random.normal(ks[4], (hidden, hidden), jnp.float32),
        "w1": sc * jax.random.normal(ks[5], (hidden, ffn), jnp.float32),
        "b1": jnp.zeros((1, ffn), jnp.float32),
        "w2": sc * jax.random.normal(ks[6], (ffn, hidden), jnp.float32),
        "b2": jnp.zeros((1, hidden), jnp.float32),
        "ln1g": jnp.ones((1, hidden), jnp.float32),
        "ln1b": jnp.zeros((1, hidden), jnp.float32),
        "ln2g": jnp.ones((1, hidden), jnp.float32),
        "ln2b": jnp.zeros((1, hidden), jnp.float32),
        # nn.Linear(hidden_size, num_labels): stored as (H, C) = weight.T
        "wc": sc * jax.random.normal(ks[7], (hidden, num_labels), jnp.float32),
        "bc": sc * jax.random.normal(ks[8], (1, num_labels), jnp.float32),
    }


if __name__ == "__main__":
    key = jax.random.PRNGKey(0)
    k_ids, k_par = jax.random.split(key)

    B, L = 2, 29                        # L_cls = 29 - 1 - 2*6 = 16
    params = init_params(k_par, vocab=25, hidden=32, ffn=64, num_labels=3)
    input_ids = jax.random.randint(k_ids, (B, L), 0, 25, dtype=jnp.int32)

    out = jax.block_until_ready(rnafm_for_token_cls(input_ids, params))
    ref = jax.block_until_ready(reference(input_ids, params))

    assert out.shape == (B, 3, L - 1 - 2 * PAD), out.shape
    # tolerance accounts for bf16 MXU operands (f32 accumulation) in the kernel
    np.testing.assert_allclose(np.asarray(out), np.asarray(ref),
                               rtol=2e-2, atol=2e-2)

    print("KERNEL_OK")
</pallas_src>

<mosaic_0001>
module attributes {stable_mosaic.version = 11 : i64} {
  func.func @rnafm_token_cls_kernel(%arg0: i32, %arg1: memref<58x1xi32, #tpu.memory_space<vmem>>, %arg2: memref<25x32xf32, #tpu.memory_space<vmem>>, %arg3: memref<32x320xbf16, #tpu.memory_space<vmem>>, %arg4: memref<64x32xbf16, #tpu.memory_space<vmem>>, %arg5: memref<8x128xf32, #tpu.memory_space<vmem>>, %arg6: memref<58x58xf32, #tpu.memory_space<vmem>>, %arg7: memref<58x128xf32, #tpu.memory_space<vmem>>) attributes {dimension_semantics = [#tpu.dimension_semantics<arbitrary>], iteration_bounds = array<i64: 1>, scalar_prefetch = 0 : i64, scratch_operands = 0 : i64, tpu.core_type = #tpu.core_type<tc>, window_params = [{pipeline_mode = #tpu.pipeline_mode<synchronous>, transform_indices = @transform_0, window_bounds = array<i64: 58, 1>}, {pipeline_mode = #tpu.pipeline_mode<synchronous>, transform_indices = @transform_1, window_bounds = array<i64: 25, 32>}, {pipeline_mode = #tpu.pipeline_mode<synchronous>, transform_indices = @transform_2, window_bounds = array<i64: 32, 320>}, {pipeline_mode = #tpu.pipeline_mode<synchronous>, transform_indices = @transform_3, window_bounds = array<i64: 64, 32>}, {pipeline_mode = #tpu.pipeline_mode<synchronous>, transform_indices = @transform_4, window_bounds = array<i64: 8, 128>}, {pipeline_mode = #tpu.pipeline_mode<synchronous>, transform_indices = @transform_5, window_bounds = array<i64: 58, 58>}, {pipeline_mode = #tpu.pipeline_mode<synchronous>, transform_indices = @transform_6, window_bounds = array<i64: 58, 128>}]} {
    %c0 = arith.constant 0 : index
    %c0_0 = arith.constant 0 : index
    %0 = vector.load %arg1[%c0, %c0_0] : memref<58x1xi32, #tpu.memory_space<vmem>>, vector<58x1xi32>
    %1 = tpu.iota {dimensions = array<i32: 1>} : vector<58x25xi32>
    %2 = vector.broadcast %0 : vector<58x1xi32> to vector<58x25xi32>
    %3 = arith.cmpi eq, %2, %1 : vector<58x25xi32>
    %4 = arith.extui %3 : vector<58x25xi1> to vector<58x25xi32>
    %5 = arith.sitofp %4 : vector<58x25xi32> to vector<58x25xf32>
    %c0_1 = arith.constant 0 : index
    %c0_2 = arith.constant 0 : index
    %6 = vector.load %arg2[%c0_1, %c0_2] : memref<25x32xf32, #tpu.memory_space<vmem>>, vector<25x32xf32>
    %cst = arith.constant dense<0.000000e+00> : vector<58x32xf32>
    %7 = tpu.matmul %5, %6, %cst {dimension_numbers = #tpu.dot_dimension_numbers<[1], [0], [0], [1], [0, 0, 1, 1], [], []>} : vector<58x25xf32>, vector<25x32xf32>, vector<58x32xf32> -> vector<58x32xf32>
    %c0_3 = arith.constant 0 : index
    %c0_4 = arith.constant 0 : index
    %8 = vector.load %arg3[%c0_3, %c0_4] : memref<32x320xbf16, #tpu.memory_space<vmem>>, vector<32x320xbf16>
    %9 = arith.truncf %7 : vector<58x32xf32> to vector<58x32xbf16>
    %10 = vector.extract_strided_slice %8 {offsets = [0, 0], sizes = [32, 96], strides = [1, 1]} : vector<32x320xbf16> to vector<32x96xbf16>
    %cst_5 = arith.constant dense<0.000000e+00> : vector<58x96xf32>
    %11 = tpu.matmul %9, %10, %cst_5 {dimension_numbers = #tpu.dot_dimension_numbers<[1], [0], [0], [1], [0, 0, 1, 1], [], []>} : vector<58x32xbf16>, vector<32x96xbf16>, vector<58x96xf32> -> vector<58x96xf32>
    %12 = vector.extract_strided_slice %11 {offsets = [0, 0], sizes = [58, 32], strides = [1, 1]} : vector<58x96xf32> to vector<58x32xf32>
    %13 = vector.extract_strided_slice %11 {offsets = [0, 32], sizes = [58, 32], strides = [1, 1]} : vector<58x96xf32> to vector<58x32xf32>
    %14 = vector.extract_strided_slice %11 {offsets = [0, 64], sizes = [58, 32], strides = [1, 1]} : vector<58x96xf32> to vector<58x32xf32>
    %15 = arith.truncf %12 : vector<58x32xf32> to vector<58x32xbf16>
    %16 = arith.truncf %13 : vector<58x32xf32> to vector<58x32xbf16>
    %cst_6 = arith.constant dense<0.000000e+00> : vector<58x58xf32>
    %17 = tpu.matmul %15, %16, %cst_6 {dimension_numbers = #tpu.dot_dimension_numbers<[1], [1], [0], [0], [0, 0, 1, 0], [], []>} : vector<58x32xbf16>, vector<58x32xbf16>, vector<58x58xf32> -> vector<58x58xf32>
    %c0_7 = arith.constant 0 : index
    %c0_8 = arith.constant 0 : index
    %18 = vector.load %arg6[%c0_7, %c0_8] : memref<58x58xf32, #tpu.memory_space<vmem>>, vector<58x58xf32>
    %19 = arith.addf %17, %18 : vector<58x58xf32>
    %cst_9 = arith.constant dense<0xFF800000> : vector<58xf32>
    %20 = vector.multi_reduction <maximumf>, %19, %cst_9 [1] : vector<58x58xf32> to vector<58xf32>
    %21 = vector.shape_cast %20 : vector<58xf32> to vector<58x1xf32>
    %22 = vector.broadcast %21 : vector<58x1xf32> to vector<58x58xf32>
    %23 = arith.subf %19, %22 : vector<58x58xf32>
    %24 = math.exp %23 : vector<58x58xf32>
    %cst_10 = arith.constant dense<0.000000e+00> : vector<58xf32>
    %25 = vector.multi_reduction <add>, %24, %cst_10 [1] : vector<58x58xf32> to vector<58xf32>
    %26 = vector.shape_cast %25 : vector<58xf32> to vector<58x1xf32>
    %27 = tpu.reciprocal %26 {approx = true} : vector<58x1xf32> -> vector<58x1xf32>
    %28 = vector.broadcast %27 : vector<58x1xf32> to vector<58x58xf32>
    %29 = arith.mulf %24, %28 : vector<58x58xf32>
    %30 = arith.truncf %29 : vector<58x58xf32> to vector<58x58xbf16>
    %31 = arith.truncf %14 : vector<58x32xf32> to vector<58x32xbf16>
    %cst_11 = arith.constant dense<0.000000e+00> : vector<58x32xf32>
    %32 = tpu.matmul %30, %31, %cst_11 {dimension_numbers = #tpu.dot_dimension_numbers<[1], [0], [0], [1], [0, 0, 1, 1], [], []>} : vector<58x58xbf16>, vector<58x32xbf16>, vector<58x32xf32> -> vector<58x32xf32>
    %33 = arith.truncf %32 : vector<58x32xf32> to vector<58x32xbf16>
    %34 = vector.extract_strided_slice %8 {offsets = [0, 96], sizes = [32, 32], strides = [1, 1]} : vector<32x320xbf16> to vector<32x32xbf16>
    %cst_12 = arith.constant dense<0.000000e+00> : vector<58x32xf32>
    %35 = tpu.matmul %33, %34, %cst_12 {dimension_numbers = #tpu.dot_dimension_numbers<[1], [0], [0], [1], [0, 0, 1, 1], [], []>} : vector<58x32xbf16>, vector<32x32xbf16>, vector<58x32xf32> -> vector<58x32xf32>
    %36 = arith.addf %7, %35 : vector<58x32xf32>
    %c2 = arith.constant 2 : index
    %c0_13 = arith.constant 0 : index
    %37 = vector.load %arg5[%c2, %c0_13] : memref<8x128xf32, #tpu.memory_space<vmem>>, vector<1x32xf32>
    %c3 = arith.constant 3 : index
    %c0_14 = arith.constant 0 : index
    %38 = vector.load %arg5[%c3, %c0_14] : memref<8x128xf32, #tpu.memory_space<vmem>>, vector<1x32xf32>
    %cst_15 = arith.constant dense<0.000000e+00> : vector<58xf32>
    %39 = vector.multi_reduction <add>, %36, %cst_15 [1] : vector<58x32xf32> to vector<58xf32>
    %40 = vector.shape_cast %39 : vector<58xf32> to vector<58x1xf32>
    %cst_16 = arith.constant 3.200000e+01 : f32
    %41 = vector.broadcast %cst_16 : f32 to vector<58x1xf32>
    %42 = arith.divf %40, %41 : vector<58x1xf32>
    %43 = vector.broadcast %42 : vector<58x1xf32> to vector<58x32xf32>
    %44 = arith.subf %36, %43 : vector<58x32xf32>
    %45 = arith.mulf %44, %44 : vector<58x32xf32>
    %cst_17 = arith.constant dense<0.000000e+00> : vector<58xf32>
    %46 = vector.multi_reduction <add>, %45, %cst_17 [1] : vector<58x32xf32> to vector<58xf32>
    %47 = vector.shape_cast %46 : vector<58xf32> to vector<58x1xf32>
    %cst_18 = arith.constant 3.200000e+01 : f32
    %48 = vector.broadcast %cst_18 : f32 to vector<58x1xf32>
    %49 = arith.divf %47, %48 : vector<58x1xf32>
    %50 = vector.broadcast %42 : vector<58x1xf32> to vector<58x32xf32>
    %51 = arith.subf %36, %50 : vector<58x32xf32>
    %cst_19 = arith.constant 9.99999974E-6 : f32
    %52 = vector.broadcast %cst_19 : f32 to vector<58x1xf32>
    %53 = arith.addf %49, %52 : vector<58x1xf32>
    %54 = math.rsqrt %53 : vector<58x1xf32>
    %55 = vector.broadcast %54 : vector<58x1xf32> to vector<58x32xf32>
    %56 = arith.mulf %51, %55 : vector<58x32xf32>
    %57 = vector.broadcast %37 : vector<1x32xf32> to vector<58x32xf32>
    %58 = arith.mulf %56, %57 : vector<58x32xf32>
    %59 = vector.broadcast %38 : vector<1x32xf32> to vector<58x32xf32>
    %60 = arith.addf %58, %59 : vector<58x32xf32>
    %61 = arith.truncf %60 : vector<58x32xf32> to vector<58x32xbf16>
    %62 = vector.extract_strided_slice %8 {offsets = [0, 256], sizes = [32, 64], strides = [1, 1]} : vector<32x320xbf16> to vector<32x64xbf16>
    %cst_20 = arith.constant dense<0.000000e+00> : vector<58x64xf32>
    %63 = tpu.matmul %61, %62, %cst_20 {dimension_numbers = #tpu.dot_dimension_numbers<[1], [0], [0], [1], [0, 0, 1, 1], [], []>} : vector<58x32xbf16>, vector<32x64xbf16>, vector<58x64xf32> -> vector<58x64xf32>
    %c0_21 = arith.constant 0 : index
    %c0_22 = arith.constant 0 : index
    %64 = vector.load %arg5[%c0_21, %c0_22] : memref<8x128xf32, #tpu.memory_space<vmem>>, vector<1x64xf32>
    %65 = vector.broadcast %64 : vector<1x64xf32> to vector<58x64xf32>
    %66 = arith.addf %63, %65 : vector<58x64xf32>
    %cst_23 = arith.constant 5.000000e-01 : f32
    %67 = vector.broadcast %cst_23 : f32 to vector<58x64xf32>
    %68 = arith.mulf %67, %66 : vector<58x64xf32>
    %cst_24 = arith.constant 4.471500e-02 : f32
    %69 = vector.broadcast %cst_24 : f32 to vector<58x64xf32>
    %70 = arith.mulf %69, %66 : vector<58x64xf32>
    %71 = arith.mulf %70, %66 : vector<58x64xf32>
    %72 = arith.mulf %71, %66 : vector<58x64xf32>
    %73 = arith.addf %66, %72 : vector<58x64xf32>
    %cst_25 = arith.constant 0.797884583 : f32
    %74 = vector.broadcast %cst_25 : f32 to vector<58x64xf32>
    %75 = arith.mulf %74, %73 : vector<58x64xf32>
    %76 = math.tanh %75 : vector<58x64xf32>
    %cst_26 = arith.constant 1.000000e+00 : f32
    %77 = vector.broadcast %cst_26 : f32 to vector<58x64xf32>
    %78 = arith.addf %77, %76 : vector<58x64xf32>
    %79 = arith.mulf %68, %78 : vector<58x64xf32>
    %80 = arith.truncf %79 : vector<58x64xf32> to vector<58x64xbf16>
    %c0_27 = arith.constant 0 : index
    %c0_28 = arith.constant 0 : index
    %81 = vector.load %arg4[%c0_27, %c0_28] : memref<64x32xbf16, #tpu.memory_space<vmem>>, vector<64x32xbf16>
    %cst_29 = arith.constant dense<0.000000e+00> : vector<58x32xf32>
    %82 = tpu.matmul %80, %81, %cst_29 {dimension_numbers = #tpu.dot_dimension_numbers<[1], [0], [0], [1], [0, 0, 1, 1], [], []>} : vector<58x64xbf16>, vector<64x32xbf16>, vector<58x32xf32> -> vector<58x32xf32>
    %c1 = arith.constant 1 : index
    %c0_30 = arith.constant 0 : index
    %83 = vector.load %arg5[%c1, %c0_30] : memref<8x128xf32, #tpu.memory_space<vmem>>, vector<1x32xf32>
    %84 = vector.broadcast %83 : vector<1x32xf32> to vector<58x32xf32>
    %85 = arith.addf %82, %84 : vector<58x32xf32>
    %86 = arith.addf %60, %85 : vector<58x32xf32>
    %c4 = arith.constant 4 : index
    %c0_31 = arith.constant 0 : index
    %87 = vector.load %arg5[%c4, %c0_31] : memref<8x128xf32, #tpu.memory_space<vmem>>, vector<1x32xf32>
    %c5 = arith.constant 5 : index
    %c0_32 = arith.constant 0 : index
    %88 = vector.load %arg5[%c5, %c0_32] : memref<8x128xf32, #tpu.memory_space<vmem>>, vector<1x32xf32>
    %cst_33 = arith.constant dense<0.000000e+00> : vector<58xf32>
    %89 = vector.multi_reduction <add>, %86, %cst_33 [1] : vector<58x32xf32> to vector<58xf32>
    %90 = vector.shape_cast %89 : vector<58xf32> to vector<58x1xf32>
    %cst_34 = arith.constant 3.200000e+01 : f32
    %91 = vector.broadcast %cst_34 : f32 to vector<58x1xf32>
    %92 = arith.divf %90, %91 : vector<58x1xf32>
    %93 = vector.broadcast %92 : vector<58x1xf32> to vector<58x32xf32>
    %94 = arith.subf %86, %93 : vector<58x32xf32>
    %95 = arith.mulf %94, %94 : vector<58x32xf32>
    %cst_35 = arith.constant dense<0.000000e+00> : vector<58xf32>
    %96 = vector.multi_reduction <add>, %95, %cst_35 [1] : vector<58x32xf32> to vector<58xf32>
    %97 = vector.shape_cast %96 : vector<58xf32> to vector<58x1xf32>
    %cst_36 = arith.constant 3.200000e+01 : f32
    %98 = vector.broadcast %cst_36 : f32 to vector<58x1xf32>
    %99 = arith.divf %97, %98 : vector<58x1xf32>
    %100 = vector.broadcast %92 : vector<58x1xf32> to vector<58x32xf32>
    %101 = arith.subf %86, %100 : vector<58x32xf32>
    %cst_37 = arith.constant 9.99999974E-6 : f32
    %102 = vector.broadcast %cst_37 : f32 to vector<58x1xf32>
    %103 = arith.addf %99, %102 : vector<58x1xf32>
    %104 = math.rsqrt %103 : vector<58x1xf32>
    %105 = vector.broadcast %104 : vector<58x1xf32> to vector<58x32xf32>
    %106 = arith.mulf %101, %105 : vector<58x32xf32>
    %107 = vector.broadcast %87 : vector<1x32xf32> to vector<58x32xf32>
    %108 = arith.mulf %106, %107 : vector<58x32xf32>
    %109 = vector.broadcast %88 : vector<1x32xf32> to vector<58x32xf32>
    %110 = arith.addf %108, %109 : vector<58x32xf32>
    %111 = arith.truncf %110 : vector<58x32xf32> to vector<58x32xbf16>
    %112 = vector.extract_strided_slice %8 {offsets = [0, 128], sizes = [32, 128], strides = [1, 1]} : vector<32x320xbf16> to vector<32x128xbf16>
    %cst_38 = arith.constant dense<0.000000e+00> : vector<58x128xf32>
    %113 = tpu.matmul %111, %112, %cst_38 {dimension_numbers = #tpu.dot_dimension_numbers<[1], [0], [0], [1], [0, 0, 1, 1], [], []>} : vector<58x32xbf16>, vector<32x128xbf16>, vector<58x128xf32> -> vector<58x128xf32>
    %c6 = arith.constant 6 : index
    %c0_39 = arith.constant 0 : index
    %114 = vector.load %arg5[%c6, %c0_39] : memref<8x128xf32, #tpu.memory_space<vmem>>, vector<1x128xf32>
    %115 = vector.broadcast %114 : vector<1x128xf32> to vector<58x128xf32>
    %116 = arith.addf %113, %115 : vector<58x128xf32>
    %c0_40 = arith.constant 0 : index
    %c0_41 = arith.constant 0 : index
    %117 = vector.load %arg7[%c0_40, %c0_41] : memref<58x128xf32, #tpu.memory_space<vmem>>, vector<58x128xf32>
    tpu.vector_store %arg7[%c0_40, %c0_41], %116 {strides = array<i32>} : memref<58x128xf32, #tpu.memory_space<vmem>>, vector<58x128xf32>,
    return
  }
  func.func @transform_0(%arg0: i32) -> (i32, i32) {
    %c0_i32 = arith.constant 0 : i32
    %c0_i32_0 = arith.constant 0 : i32
    %c0_i32_1 = arith.constant 0 : i32
    return %c0_i32, %c0_i32_0 : i32, i32
  }
  func.func @transform_1(%arg0: i32) -> (i32, i32) {
    %c0_i32 = arith.constant 0 : i32
    %c0_i32_0 = arith.constant 0 : i32
    %c0_i32_1 = arith.constant 0 : i32
    return %c0_i32, %c0_i32_0 : i32, i32
  }
  func.func @transform_2(%arg0: i32) -> (i32, i32) {
    %c0_i32 = arith.constant 0 : i32
    %c0_i32_0 = arith.constant 0 : i32
    %c0_i32_1 = arith.constant 0 : i32
    return %c0_i32, %c0_i32_0 : i32, i32
  }
  func.func @transform_3(%arg0: i32) -> (i32, i32) {
    %c0_i32 = arith.constant 0 : i32
    %c0_i32_0 = arith.constant 0 : i32
    %c0_i32_1 = arith.constant 0 : i32
    return %c0_i32, %c0_i32_0 : i32, i32
  }
  func.func @transform_4(%arg0: i32) -> (i32, i32) {
    %c0_i32 = arith.constant 0 : i32
    %c0_i32_0 = arith.constant 0 : i32
    %c0_i32_1 = arith.constant 0 : i32
    return %c0_i32, %c0_i32_0 : i32, i32
  }
  func.func @transform_5(%arg0: i32) -> (i32, i32) {
    %c0_i32 = arith.constant 0 : i32
    %c0_i32_0 = arith.constant 0 : i32
    %c0_i32_1 = arith.constant 0 : i32
    return %c0_i32, %c0_i32_0 : i32, i32
  }
  func.func @transform_6(%arg0: i32) -> (i32, i32) {
    %c0_i32 = arith.constant 0 : i32
    %c0_i32_0 = arith.constant 0 : i32
    %c0_i32_1 = arith.constant 0 : i32
    return %c0_i32, %c0_i32_0 : i32, i32
  }
}

</mosaic_0001>

<llo_original>
// kernel: tpu_custom_call.1
$region0: #{tpu_custom_call.1}
  #allocation0 [shape = 'u32[]', space=smem, size = 0x4, offset = 0x4, fixed_abs, tag = 'smem constant byte address 0x4 - core index']
  #allocation1 [shape = 'u32[144,128]{1,0:T(1,128)}', space=vmem, size = 0x12000, scoped, tag = 'internal scratch']
  %s0 = inlined_call_operand.vmem [shape: s32[58,1], index: 0, kind: input, shape index: {}]
  %s1 = inlined_call_operand.hbm [shape: f32[25,32], index: 1, kind: input, shape index: {}]
  %s2 = inlined_call_operand.vmem [shape: bf16[32,320], index: 2, kind: input, shape index: {}]
  %s3 = inlined_call_operand.vmem [shape: bf16[64,32], index: 3, kind: input, shape index: {}]
  %s4 = inlined_call_operand.vmem [shape: f32[8,128], index: 4, kind: input, shape index: {}]
  %s5 = inlined_call_operand.vmem [shape: f32[58,58], index: 5, kind: input, shape index: {}]
  %s6 = inlined_call_operand.hbm [shape: f32[58,128], index: 6, kind: output, shape index: {}]
  %s7 = sld [smem:[#allocation0]]
  $region38: #{tpu_custom_call.1} parent=0
    _
  %s9 = ssub.s32 1, %s7
  %s10 = scalar_select 0, %s9, %s7
  $region1: #{tpu_custom_call.1} parent=0
    #allocation2 [shape = 'u8[16384]{0}', space=vmem, size = 0x4000, scoped, tag = 'input window, operand 1, single buffered']
    #allocation3 [shape = 's32[1]{0}', space=sflag, size = 0x4, scoped, tag = 'scoped memory for tpu_custom_call.1']
    #allocation4 [shape = 's32[1]{0}', space=sflag, size = 0x4, scoped, tag = 'scoped memory for tpu_custom_call.1']
    #allocation5 [shape = 'u8[32768]{0}', space=vmem, size = 0x8000, scoped, tag = 'output window, operand 0, single buffered']
    %11 = vsyncpa [#allocation3], 0
    %12 = vsyncpa [#allocation4], 0
    // Predicated region
    $region2: #{tpu_custom_call.1} parent=1 // pred_check
      _
    $region3: #{tpu_custom_call.1} parent=1 // pred_check_branch
      %14 = sbr.rel (0) target = $region5
    $region4: #{tpu_custom_call.1} parent=1 // pred_region
      _
    $region5: #{tpu_custom_call.1} parent=1 // pred_fallthru
      _
    // Predicated region
    $region6: #{tpu_custom_call.1} parent=1 // pred_check
      _
    $region7: #{tpu_custom_call.1} parent=1 // pred_check_branch
      %16 = sbr.rel (0) target = $region9
    $region8: #{tpu_custom_call.1} parent=1 // pred_region
      %s18 = ssub.s32 512, 512
      %19 = vsyncadd [#allocation3], %s18
      %s20 = sshll.u32 [#allocation2], 4
      %s21 = int_to_ptr.vmem [resolvable:$true] %s20
      %26 = dma.hbm_to_vmem [thread:$0]  %s1, 512, %s21, [#allocation3], 128, 128, 8
    $region9: #{tpu_custom_call.1} parent=1 // pred_fallthru
      _
    // Predicated region
    $region10: #{tpu_custom_call.1} parent=1 // pred_check
      _
    $region11: #{tpu_custom_call.1} parent=1 // pred_check_branch
      %28 = sbr.rel (0) target = $region13
    $region12: #{tpu_custom_call.1} parent=1 // pred_region
      _
    $region13: #{tpu_custom_call.1} parent=1 // pred_fallthru
      _
    // Predicated region
    $region14: #{tpu_custom_call.1} parent=1 // pred_check
      _
    $region15: #{tpu_custom_call.1} parent=1 // pred_check_branch
      %30 = sbr.rel (0) target = $region17
    $region16: #{tpu_custom_call.1} parent=1 // pred_region
      _
    $region17: #{tpu_custom_call.1} parent=1 // pred_fallthru
      _
    // Predicated region
    $region18: #{tpu_custom_call.1} parent=1 // pred_check
      _
    $region19: #{tpu_custom_call.1} parent=1 // pred_check_branch
      %32 = sbr.rel (0) target = $region21
    $region20: #{tpu_custom_call.1} parent=1 // pred_region
      _
    $region21: #{tpu_custom_call.1} parent=1 // pred_fallthru
      _
    // Predicated region
    $region22: #{tpu_custom_call.1} parent=1 // pred_check
      _
    $region23: #{tpu_custom_call.1} parent=1 // pred_check_branch
      %34 = sbr.rel (0) target = $region25
    $region24: #{tpu_custom_call.1} parent=1 // pred_region
      _
    $region25: #{tpu_custom_call.1} parent=1 // pred_fallthru
      _
    // Predicated region
    $region26: #{tpu_custom_call.1} parent=1 // pred_check
      _
    $region27: #{tpu_custom_call.1} parent=1 // pred_check_branch
      %36 = sbr.rel (0) target = $region29
    $region28: #{tpu_custom_call.1} parent=1 // pred_region
      %37 = dma.done [#allocation3], 512
    $region29: #{tpu_custom_call.1} parent=1 // pred_fallthru
      _
    %v39 = vld [vmem:[%s0] sm:$0xff]
    %v40 = vld [vmem:[%s0 + $0x8] sm:$0xff]
    %v41 = vld [vmem:[%s0 + $0x10] sm:$0xff]
    %v42 = vld [vmem:[%s0 + $0x18] sm:$0xff]
    %v43 = vld [vmem:[%s0 + $0x20] sm:$0xff]
    %v44 = vld [vmem:[%s0 + $0x28] sm:$0xff]
    %v45 = vld [vmem:[%s0 + $0x30] sm:$0xff]
    %v46 = vld [vmem:[%s0 + $0x38] sm:$0x3]
    %v47 = vlaneseq
    %v48 = vand.u32 %v47, 127
    %49 = vset.pattern.permute.xlu0 0
    %50 = vperm.xlu0 %49, %v39
    %v51 = vpop.permute.xlu0 %50
    %52 = vset.pattern.permute.xlu0 0
    %53 = vperm.xlu0 %52, %v40
    %v54 = vpop.permute.xlu0 %53
    %55 = vset.pattern.permute.xlu0 0
    %56 = vperm.xlu0 %55, %v41
    %v57 = vpop.permute.xlu0 %56
    %58 = vset.pattern.permute.xlu0 0
    %59 = vperm.xlu0 %58, %v42
    %v60 = vpop.permute.xlu0 %59
    %61 = vset.pattern.permute.xlu0 0
    %62 = vperm.xlu0 %61, %v43
    %v63 = vpop.permute.xlu0 %62
    %64 = vset.pattern.permute.xlu0 0
    %65 = vperm.xlu0 %64, %v44
    %v66 = vpop.permute.xlu0 %65
    %67 = vset.pattern.permute.xlu0 0
    %68 = vperm.xlu0 %67, %v45
    %v69 = vpop.permute.xlu0 %68
    %70 = vset.pattern.permute.xlu0 0
    %71 = vperm.xlu0 %70, %v46
    %v72 = vpop.permute.xlu0 %71
    %vm73 = vcmp.eq.s32.totalorder %v51, %v48
    %vm74 = vcmp.eq.s32.totalorder %v54, %v48
    %vm75 = vcmp.eq.s32.totalorder %v57, %v48
    %vm76 = vcmp.eq.s32.totalorder %v60, %v48
    %vm77 = vcmp.eq.s32.totalorder %v63, %v48
    %vm78 = vcmp.eq.s32.totalorder %v66, %v48
    %vm79 = vcmp.eq.s32.totalorder %v69, %v48
    %vm80 = vcmp.eq.s32.totalorder %v72, %v48
    %v81 = vsel %vm73, 1, 0
    %v82 = vsel %vm74, 1, 0
    %v83 = vsel %vm75, 1, 0
    %v84 = vsel %vm76, 1, 0
    %v85 = vsel %vm77, 1, 0
    %v86 = vsel %vm78, 1, 0
    %v87 = vsel %vm79, 1, 0
    %v88 = vsel %vm80, 1, 0
    %v89 = vcvt.s32.f32 %v81
    %v90 = vcvt.s32.f32 %v82
    %v91 = vcvt.s32.f32 %v83
    %v92 = vcvt.s32.f32 %v84
    %v93 = vcvt.s32.f32 %v85
    %v94 = vcvt.s32.f32 %v86
    %v95 = vcvt.s32.f32 %v87
    %v96 = vcvt.s32.f32 %v88
    %v97 = vld [vmem:[#allocation2] sm:$0xff]
    %v98 = vld [vmem:[#allocation2 + $0x8] sm:$0xff]
    %v99 = vld [vmem:[#allocation2 + $0x10] sm:$0xff]
    %v100 = vld [vmem:[#allocation2 + $0x18] sm:$0x1]
    %vm101 = vcmask 203776
    %v103 = vsel %vm101, %v89, 0
    %v106 = vsel %vm101, %v90, 0
    %v109 = vsel %vm101, %v91, 0
    %v112 = vsel %vm101, %v92, 0
    %v115 = vsel %vm101, %v93, 0
    %v118 = vsel %vm101, %v94, 0
    %v121 = vsel %vm101, %v95, 0
    %v124 = vsel %vm101, %v96, 0
    %vm126 = vcmask 1040384
    %v128 = vsel %vm126, %v100, 0
    %130 = vmatprep.subr.mxu0 0.0
    %131 = vmatpush1.msra.mxu0 %v97
    %132 = vmatprep.subr.mxu0 0.0
    %133 = vmatpush1.msra.mxu0 %v98
    %134 = vmatprep.subr.mxu0 0.0
    %135 = vmatpush1.msra.mxu0 %v99
    %136 = vmatprep.subr.mxu0 0.0
    %137 = vmatpush1.msra.mxu0 %v128
    %138 = vmatprep.subr.mxu0 0.0
    %139 = vmatpush1.msra.mxu0 0.0
    %140 = vmatprep.subr.mxu0 0.0
    %141 = vmatpush1.msra.mxu0 0.0
    %142 = vmatprep.subr.mxu0 0.0
    %143 = vmatpush1.msra.mxu0 0.0
    %144 = vmatprep.subr.mxu0 0.0
    %145 = vmatpush1.msra.mxu0 0.0
    %146 = vmatprep.subr.mxu0 0.0
    %147 = vmatpush1.msra.mxu0 0.0
    %148 = vmatprep.subr.mxu0 0.0
    %149 = vmatpush1.msra.mxu0 0.0
    %150 = vmatprep.subr.mxu0 0.0
    %151 = vmatpush1.msra.mxu0 0.0
    %152 = vmatprep.subr.mxu0 0.0
    %153 = vmatpush1.msra.mxu0 0.0
    %154 = vmatprep.subr.mxu0 0.0
    %155 = vmatpush1.msra.mxu0 0.0
    %156 = vmatprep.subr.mxu0 0.0
    %157 = vmatpush1.msra.mxu0 0.0
    %158 = vmatprep.subr.mxu0 0.0
    %159 = vmatpush1.msra.mxu0 0.0
    %160 = vmatprep.subr.mxu0 0.0
    %161 = vmatpush1.msra.mxu0 0.0
    %162 = vmatprep.subr.mxu0 0.0
    %163 = vmatpush1.msra.mxu0 0.0
    %164 = vmatprep.subr.mxu0 0.0
    %165 = vmatpush1.msra.mxu0 0.0
    %166 = vmatprep.subr.mxu0 0.0
    %167 = vmatpush1.msra.mxu0 0.0
    %168 = vmatprep.subr.mxu0 0.0
    %169 = vmatpush1.msra.mxu0 0.0
    %170 = vmatprep.subr.mxu0 0.0
    %171 = vmatpush1.msra.mxu0 0.0
    %172 = vmatprep.subr.mxu0 0.0
    %173 = vmatpush1.msra.mxu0 0.0
    %174 = vmatprep.subr.mxu0 0.0
    %175 = vmatpush1.msra.mxu0 0.0
    %176 = vmatprep.subr.mxu0 0.0
    %177 = vmatpush1.msra.mxu0 0.0
    %178 = vmatprep.subr.mxu0 0.0
    %179 = vmatpush1.msra.mxu0 0.0
    %180 = vmatprep.subr.mxu0 0.0
    %181 = vmatpush1.msra.mxu0 0.0
    %182 = vmatprep.subr.mxu0 0.0
    %183 = vmatpush1.msra.mxu0 0.0
    %184 = vmatprep.subr.mxu0 0.0
    %185 = vmatpush1.msra.mxu0 0.0
    %186 = vmatprep.subr.mxu0 0.0
    %187 = vmatpush1.msra.mxu0 0.0
    %188 = vmatprep.subr.mxu0 0.0
    %189 = vmatpush1.msra.mxu0 0.0
    %190 = vmatprep.subr.mxu0 0.0
    %191 = vmatpush1.msra.mxu0 0.0
    %192 = vmatprep.subr.mxu0 0.0
    %193 = vmatpush1.msra.mxu0 0.0
    %194 = vmatprep.mubr.f32.mxu0 0.0
    %195 = vmatmul.mubr.f32.gmra.mrb[0].mxu0 %v103
    %v196 = vpop.f32.mrb[0].mxu0
    %v197 = vadd.f32 0.0, %v196
    %v198 = vpop.f32.mrb[0].mxu0
    %199 = vmatprep.mubr.f32.mxu0 0.0
    %200 = vmatmul.mubr.f32.gmra.mrb[0].mxu0 %v106
    %v201 = vpop.f32.mrb[0].mxu0
    %v202 = vadd.f32 0.0, %v201
    %v203 = vpop.f32.mrb[0].mxu0
    %204 = vmatprep.mubr.f32.mxu0 0.0
    %205 = vmatmul.mubr.f32.gmra.mrb[0].mxu0 %v109
    %v206 = vpop.f32.mrb[0].mxu0
    %v207 = vadd.f32 0.0, %v206
    %v208 = vpop.f32.mrb[0].mxu0
    %209 = vmatprep.mubr.f32.mxu0 0.0
    %210 = vmatmul.mubr.f32.gmra.mrb[0].mxu0 %v112
    %v211 = vpop.f32.mrb[0].mxu0
    %v212 = vadd.f32 0.0, %v211
    %v213 = vpop.f32.mrb[0].mxu0
    %214 = vmatprep.mubr.f32.mxu0 0.0
    %215 = vmatmul.mubr.f32.gmra.mrb[0].mxu0 %v115
    %v216 = vpop.f32.mrb[0].mxu0
    %v217 = vadd.f32 0.0, %v216
    %v218 = vpop.f32.mrb[0].mxu0
    %219 = vmatprep.mubr.f32.mxu0 0.0
    %220 = vmatmul.mubr.f32.gmra.mrb[0].mxu0 %v118
    %v221 = vpop.f32.mrb[0].mxu0
    %v222 = vadd.f32 0.0, %v221
    %v223 = vpop.f32.mrb[0].mxu0
    %224 = vmatprep.mubr.f32.mxu0 0.0
    %225 = vmatmul.mubr.f32.gmra.mrb[0].mxu0 %v121
    %v226 = vpop.f32.mrb[0].mxu0
    %v227 = vadd.f32 0.0, %v226
    %v228 = vpop.f32.mrb[0].mxu0
    %229 = vmatprep.mubr.f32.mxu0 0.0
    %230 = vmatmul.mubr.f32.gmra.mrb[0].mxu0 %v124
    %v231 = vpop.f32.mrb[0].mxu0
    %v232 = vadd.f32 0.0, %v231
    %v233 = vpop.f32.mrb[0].mxu0
    %234 = vdwg.mxu0
    %v235 = vld [vmem:[%s2] sm:$0xff]
    %v236 = vld [vmem:[%s2 + $0x8] sm:$0xf]
    %v237 = vld [vmem:[%s2 + $0xc] sm:$0xff]
    %v238 = vld [vmem:[%s2 + $0x14] sm:$0xf]
    %v239 = vld [vmem:[%s2 + $0x18] sm:$0xff]
    %v240 = vld [vmem:[%s2 + $0x20] sm:$0xf]
    %v241 = vld [vmem:[%s2 + $0x24] sm:$0xff]
    %v242 = vld [vmem:[%s2 + $0x2c] sm:$0xf]
    %v243 = vpack.c.bf16 %v202, %v197
    %v244 = vpack.c.bf16 %v212, %v207
    %v245 = vpack.c.bf16 %v222, %v217
    %v246 = vpack.c.bf16 %v232, %v227
    %v251 = vunpack.c.l.b16 %v235
    %v252 = vunpack.c.l.b16 %v237
    %v253 = vunpack.c.l.b16 %v239
    %v254 = vunpack.c.l.b16 %v241
    %v255 = vpack.c.b16 %v252, %v251
    %v256 = vpack.c.b16 %v254, %v253
    %vm259 = vcmask 261120
    %v261 = vsel %vm259, %v243, 0
    %v264 = vsel %vm259, %v244, 0
    %v267 = vsel %vm259, %v245, 0
    %v270 = vsel %vm259, %v246, 0
    %272 = vmatprep.subr.bf16.mxu0 0
    %273 = vmatpush1.bf16.msra.mxu0 %v255
    %274 = vmatprep.subr.bf16.mxu0 0
    %275 = vmatpush1.bf16.msra.mxu0 %v256
    %276 = vmatprep.subr.bf16.mxu0 0
    %277 = vmatpush1.bf16.msra.mxu0 0
    %278 = vmatprep.subr.bf16.mxu0 0
    %279 = vmatpush1.bf16.msra.mxu0 0
    %280 = vmatprep.subr.bf16.mxu0 0
    %281 = vmatpush1.bf16.msra.mxu0 0
    %282 = vmatprep.subr.bf16.mxu0 0
    %283 = vmatpush1.bf16.msra.mxu0 0
    %284 = vmatprep.subr.bf16.mxu0 0
    %285 = vmatpush1.bf16.msra.mxu0 0
    %286 = vmatprep.subr.bf16.mxu0 0
    %287 = vmatpush1.bf16.msra.mxu0 0
    %288 = vmatprep.subr.bf16.mxu0 0
    %289 = vmatpush1.bf16.msra.mxu0 0
    %290 = vmatprep.subr.bf16.mxu0 0
    %291 = vmatpush1.bf16.msra.mxu0 0
    %292 = vmatprep.subr.bf16.mxu0 0
    %293 = vmatpush1.bf16.msra.mxu0 0
    %294 = vmatprep.subr.bf16.mxu0 0
    %295 = vmatpush1.bf16.msra.mxu0 0
    %296 = vmatprep.subr.bf16.mxu0 0
    %297 = vmatpush1.bf16.msra.mxu0 0
    %298 = vmatprep.subr.bf16.mxu0 0
    %299 = vmatpush1.bf16.msra.mxu0 0
    %300 = vmatprep.subr.bf16.mxu0 0
    %301 = vmatpush1.bf16.msra.mxu0 0
    %302 = vmatprep.subr.bf16.mxu0 0
    %303 = vmatpush1.bf16.msra.mxu0 0
    %304 = vmatprep.mubr.bf16.mxu0 0
    %305 = vmatmul.mubr.bf16.gmra.mrb[0].mxu0 %v261
    %v306 = vpop.f32.mrb[0].mxu0
    %v307 = vadd.f32 0.0, %v306
    %v308 = vpop.f32.mrb[0].mxu0
    %v309 = vpop.f32.mrb[0].mxu0
    %v310 = vadd.f32 0.0, %v309
    %v311 = vpop.f32.mrb[0].mxu0
    %312 = vmatprep.mubr.bf16.mxu0 0
    %313 = vmatmul.mubr.bf16.gmra.mrb[0].mxu0 %v264
    %v314 = vpop.f32.mrb[0].mxu0
    %v315 = vadd.f32 0.0, %v314
    %v316 = vpop.f32.mrb[0].mxu0
    %v317 = vpop.f32.mrb[0].mxu0
    %v318 = vadd.f32 0.0, %v317
    %v319 = vpop.f32.mrb[0].mxu0
    %320 = vmatprep.mubr.bf16.mxu0 0
    %321 = vmatmul.mubr.bf16.gmra.mrb[0].mxu0 %v267
    %v322 = vpop.f32.mrb[0].mxu0
    %v323 = vadd.f32 0.0, %v322
    %v324 = vpop.f32.mrb[0].mxu0
    %v325 = vpop.f32.mrb[0].mxu0
    %v326 = vadd.f32 0.0, %v325
    %v327 = vpop.f32.mrb[0].mxu0
    %328 = vmatprep.mubr.bf16.mxu0 0
    %329 = vmatmul.mubr.bf16.gmra.mrb[0].mxu0 %v270
    %v330 = vpop.f32.mrb[0].mxu0
    %v331 = vadd.f32 0.0, %v330
    %v332 = vpop.f32.mrb[0].mxu0
    %v333 = vpop.f32.mrb[0].mxu0
    %v334 = vadd.f32 0.0, %v333
    %v335 = vpop.f32.mrb[0].mxu0
    %336 = vdwg.mxu0
    %v337 = vpack.c.bf16 %v310, %v307
    %v338 = vpack.c.bf16 %v318, %v315
    %v339 = vpack.c.bf16 %v326, %v323
    %v340 = vpack.c.bf16 %v334, %v331
    %v341 = vld [vmem:[%s5] sm:$0xff]
    %v342 = vld [vmem:[%s5 + $0x8] sm:$0xff]
    %v343 = vld [vmem:[%s5 + $0x10] sm:$0xff]
    %v344 = vld [vmem:[%s5 + $0x18] sm:$0xff]
    %v345 = vld [vmem:[%s5 + $0x20] sm:$0xff]
    %v346 = vld [vmem:[%s5 + $0x28] sm:$0xff]
    %v347 = vld [vmem:[%s5 + $0x30] sm:$0xff]
    %v348 = vld [vmem:[%s5 + $0x38] sm:$0x3]
    %353 = vrot.lane.b32.xlu0 %v337, 96
    %v354 = vpop.permute.xlu0 %353
    %355 = vrot.lane.b32.xlu0 %v338, 96
    %v356 = vpop.permute.xlu0 %355
    %357 = vrot.lane.b32.xlu0 %v339, 96
    %v358 = vpop.permute.xlu0 %357
    %359 = vrot.lane.b32.xlu0 %v340, 96
    %v360 = vpop.permute.xlu0 %359
    %v362 = vsel %vm259, %v337, 0
    %v365 = vsel %vm259, %v338, 0
    %v368 = vsel %vm259, %v339, 0
    %v371 = vsel %vm259, %v340, 0
    %v374 = vsel %vm259, %v354, 0
    %v377 = vsel %vm259, %v356, 0
    %v380 = vsel %vm259, %v358, 0
    %v383 = vsel %vm259, %v360, 0
    %385 = vmatprep.subr.bf16.mxu0 0
    %386 = vmatpush1.bf16.xpose.msra.mxu0 %v374
    %387 = vmatprep.subr.bf16.mxu0 0
    %388 = vmatpush1.bf16.xpose.msra.mxu0 %v377
    %389 = vmatprep.subr.bf16.mxu0 0
    %390 = vmatpush1.bf16.xpose.msra.mxu0 %v380
    %391 = vmatprep.subr.bf16.mxu0 0
    %392 = vmatpush1.bf16.xpose.msra.mxu0 %v383
    %393 = vmatprep.subr.bf16.mxu0 0
    %394 = vmatpush1.bf16.xpose.msra.mxu0 0
    %395 = vmatprep.subr.bf16.mxu0 0
    %396 = vmatpush1.bf16.xpose.msra.mxu0 0
    %397 = vmatprep.subr.bf16.mxu0 0
    %398 = vmatpush1.bf16.xpose.msra.mxu0 0
    %399 = vmatprep.subr.bf16.mxu0 0
    %400 = vmatpush1.bf16.xpose.msra.mxu0 0
    %401 = vmatprep.subr.bf16.mxu0 0
    %402 = vmatpush1.bf16.xpose.msra.mxu0 0
    %403 = vmatprep.subr.bf16.mxu0 0
    %404 = vmatpush1.bf16.xpose.msra.mxu0 0
    %405 = vmatprep.subr.bf16.mxu0 0
    %406 = vmatpush1.bf16.xpose.msra.mxu0 0
    %407 = vmatprep.subr.bf16.mxu0 0
    %408 = vmatpush1.bf16.xpose.msra.mxu0 0
    %409 = vmatprep.subr.bf16.mxu0 0
    %410 = vmatpush1.bf16.xpose.msra.mxu0 0
    %411 = vmatprep.subr.bf16.mxu0 0
    %412 = vmatpush1.bf16.xpose.msra.mxu0 0
    %413 = vmatprep.subr.bf16.mxu0 0
    %414 = vmatpush1.bf16.xpose.msra.mxu0 0
    %415 = vmatprep.subr.bf16.mxu0 0
    %416 = vmatpush1.bf16.xpose.msra.mxu0 0
    %417 = vmatprep.mubr.bf16.mxu0 0
    %418 = vmatmul.mubr.bf16.gmra.mrb[0].mxu0 %v362
    %v419 = vpop.f32.mrb[0].mxu0
    %v420 = vadd.f32 %v341, %v419
    %v421 = vpop.f32.mrb[0].mxu0
    %v422 = vpop.f32.mrb[0].mxu0
    %v423 = vadd.f32 %v342, %v422
    %v424 = vpop.f32.mrb[0].mxu0
    %425 = vmatprep.mubr.bf16.mxu0 0
    %426 = vmatmul.mubr.bf16.gmra.mrb[0].mxu0 %v365
    %v427 = vpop.f32.mrb[0].mxu0
    %v428 = vadd.f32 %v343, %v427
    %v429 = vpop.f32.mrb[0].mxu0
    %v430 = vpop.f32.mrb[0].mxu0
    %v431 = vadd.f32 %v344, %v430
    %v432 = vpop.f32.mrb[0].mxu0
    %433 = vmatprep.mubr.bf16.mxu0 0
    %434 = vmatmul.mubr.bf16.gmra.mrb[0].mxu0 %v368
    %v435 = vpop.f32.mrb[0].mxu0
    %v436 = vadd.f32 %v345, %v435
    %v437 = vpop.f32.mrb[0].mxu0
    %v438 = vpop.f32.mrb[0].mxu0
    %v439 = vadd.f32 %v346, %v438
    %v440 = vpop.f32.mrb[0].mxu0
    %441 = vmatprep.mubr.bf16.mxu0 0
    %442 = vmatmul.mubr.bf16.gmra.mrb[0].mxu0 %v371
    %v443 = vpop.f32.mrb[0].mxu0
    %v444 = vadd.f32 %v347, %v443
    %v445 = vpop.f32.mrb[0].mxu0
    %v446 = vpop.f32.mrb[0].mxu0
    %v447 = vadd.f32 %v348, %v446
    %v448 = vpop.f32.mrb[0].mxu0
    %449 = vdwg.mxu0
    %vm450 = vcmask 474112
    %v451 = vsel %vm450, %v420, -inf
    %452 = vmax.xlane.f32.xlu0 %v451
    %v453 = vpop.xlane.xlu0 %452
    %v454 = vsel %vm450, %v423, -inf
    %455 = vmax.xlane.f32.xlu0 %v454
    %v456 = vpop.xlane.xlu0 %455
    %v457 = vsel %vm450, %v428, -inf
    %458 = vmax.xlane.f32.xlu0 %v457
    %v459 = vpop.xlane.xlu0 %458
    %v460 = vsel %vm450, %v431, -inf
    %461 = vmax.xlane.f32.xlu0 %v460
    %v462 = vpop.xlane.xlu0 %461
    %v463 = vsel %vm450, %v436, -inf
    %464 = vmax.xlane.f32.xlu0 %v463
    %v465 = vpop.xlane.xlu0 %464
    %v466 = vsel %vm450, %v439, -inf
    %467 = vmax.xlane.f32.xlu0 %v466
    %v468 = vpop.xlane.xlu0 %467
    %v469 = vsel %vm450, %v444, -inf
    %470 = vmax.xlane.f32.xlu0 %v469
    %v471 = vpop.xlane.xlu0 %470
    %vm472 = vcmask 467968
    %v473 = vsel %vm472, %v447, -inf
    %474 = vmax.xlane.f32.xlu0 %v473
    %v475 = vpop.xlane.xlu0 %474
    %v476 = vsub.f32 %v420, %v453
    %v477 = vsub.f32 %v423, %v456
    %v478 = vsub.f32 %v428, %v459
    %v479 = vsub.f32 %v431, %v462
    %v480 = vsub.f32 %v436, %v465
    %v481 = vsub.f32 %v439, %v468
    %v482 = vsub.f32 %v444, %v471
    %v483 = vsub.f32 %v447, %v475
    %v484 = vmul.f32 %v476, 1.442695
    %v485 = vpow.pop %v484
    %v486 = vmul.f32 %v477, 1.442695
    %v487 = vpow.pop %v486
    %v488 = vmul.f32 %v478, 1.442695
    %v489 = vpow.pop %v488
    %v490 = vmul.f32 %v479, 1.442695
    %v491 = vpow.pop %v490
    %v492 = vmul.f32 %v480, 1.442695
    %v493 = vpow.pop %v492
    %v494 = vmul.f32 %v481, 1.442695
    %v495 = vpow.pop %v494
    %v496 = vmul.f32 %v482, 1.442695
    %v497 = vpow.pop %v496
    %v498 = vmul.f32 %v483, 1.442695
    %v499 = vpow.pop %v498
    %v500 = vsel %vm450, %v485, 0.0
    %501 = vadd.xlane.f32.xlu0 %v500
    %v502 = vpop.xlane.xlu0 %501
    %v503 = vsel %vm450, %v487, 0.0
    %504 = vadd.xlane.f32.xlu0 %v503
    %v505 = vpop.xlane.xlu0 %504
    %v506 = vsel %vm450, %v489, 0.0
    %507 = vadd.xlane.f32.xlu0 %v506
    %v508 = vpop.xlane.xlu0 %507
    %v509 = vsel %vm450, %v491, 0.0
    %510 = vadd.xlane.f32.xlu0 %v509
    %v511 = vpop.xlane.xlu0 %510
    %v512 = vsel %vm450, %v493, 0.0
    %513 = vadd.xlane.f32.xlu0 %v512
    %v514 = vpop.xlane.xlu0 %513
    %v515 = vsel %vm450, %v495, 0.0
    %516 = vadd.xlane.f32.xlu0 %v515
    %v517 = vpop.xlane.xlu0 %516
    %v518 = vsel %vm450, %v497, 0.0
    %519 = vadd.xlane.f32.xlu0 %v518
    %v520 = vpop.xlane.xlu0 %519
    %v521 = vsel %vm472, %v499, 0.0
    %522 = vadd.xlane.f32.xlu0 %v521
    %v523 = vpop.xlane.xlu0 %522
    %v524 = vrcp.pop %v502
    %v525 = vrcp.pop %v505
    %v526 = vrcp.pop %v508
    %v527 = vrcp.pop %v511
    %v528 = vrcp.pop %v514
    %v529 = vrcp.pop %v517
    %v530 = vrcp.pop %v520
    %v531 = vrcp.pop %v523
    %v532 = vmul.f32 %v485, %v524
    %v533 = vmul.f32 %v487, %v525
    %v534 = vmul.f32 %v489, %v526
    %v535 = vmul.f32 %v491, %v527
    %v536 = vmul.f32 %v493, %v528
    %v537 = vmul.f32 %v495, %v529
    %v538 = vmul.f32 %v497, %v530
    %v539 = vmul.f32 %v499, %v531
    %v540 = vpack.c.bf16 %v533, %v532
    %v541 = vpack.c.bf16 %v535, %v534
    %v542 = vpack.c.bf16 %v537, %v536
    %v543 = vpack.c.bf16 %v539, %v538
    %544 = vrot.lane.b32.xlu0 %v337, 64
    %v545 = vpop.permute.xlu0 %544
    %546 = vrot.lane.b32.xlu0 %v338, 64
    %v547 = vpop.permute.xlu0 %546
    %548 = vrot.lane.b32.xlu0 %v339, 64
    %v549 = vpop.permute.xlu0 %548
    %550 = vrot.lane.b32.xlu0 %v340, 64
    %v551 = vpop.permute.xlu0 %550
    %v556 = vsel %vm450, %v540, 0
    %v559 = vsel %vm450, %v541, 0
    %v562 = vsel %vm450, %v542, 0
    %v565 = vsel %vm450, %v543, 0
    %vm567 = vcmask 1044480
    %v569 = vsel %vm567, %v551, 0
    %571 = vmatprep.subr.bf16.mxu0 0
    %572 = vmatpush1.bf16.msra.mxu0 %v545
    %573 = vmatprep.subr.bf16.mxu0 0
    %574 = vmatpush1.bf16.msra.mxu0 %v547
    %575 = vmatprep.subr.bf16.mxu0 0
    %576 = vmatpush1.bf16.msra.mxu0 %v549
    %577 = vmatprep.subr.bf16.mxu0 0
    %578 = vmatpush1.bf16.msra.mxu0 %v569
    %579 = vmatprep.subr.bf16.mxu0 0
    %580 = vmatpush1.bf16.msra.mxu0 0
    %581 = vmatprep.subr.bf16.mxu0 0
    %582 = vmatpush1.bf16.msra.mxu0 0
    %583 = vmatprep.subr.bf16.mxu0 0
    %584 = vmatpush1.bf16.msra.mxu0 0
    %585 = vmatprep.subr.bf16.mxu0 0
    %586 = vmatpush1.bf16.msra.mxu0 0
    %587 = vmatprep.subr.bf16.mxu0 0
    %588 = vmatpush1.bf16.msra.mxu0 0
    %589 = vmatprep.subr.bf16.mxu0 0
    %590 = vmatpush1.bf16.msra.mxu0 0
    %591 = vmatprep.subr.bf16.mxu0 0
    %592 = vmatpush1.bf16.msra.mxu0 0
    %593 = vmatprep.subr.bf16.mxu0 0
    %594 = vmatpush1.bf16.msra.mxu0 0
    %595 = vmatprep.subr.bf16.mxu0 0
    %596 = vmatpush1.bf16.msra.mxu0 0
    %597 = vmatprep.subr.bf16.mxu0 0
    %598 = vmatpush1.bf16.msra.mxu0 0
    %599 = vmatprep.subr.bf16.mxu0 0
    %600 = vmatpush1.bf16.msra.mxu0 0
    %601 = vmatprep.subr.bf16.mxu0 0
    %602 = vmatpush1.bf16.msra.mxu0 0
    %603 = vmatprep.mubr.bf16.mxu0 0
    %604 = vmatmul.mubr.bf16.gmra.mrb[0].mxu0 %v556
    %v605 = vpop.f32.mrb[0].mxu0
    %v606 = vadd.f32 0.0, %v605
    %v607 = vpop.f32.mrb[0].mxu0
    %v608 = vpop.f32.mrb[0].mxu0
    %v609 = vadd.f32 0.0, %v608
    %v610 = vpop.f32.mrb[0].mxu0
    %611 = vmatprep.mubr.bf16.mxu0 0
    %612 = vmatmul.mubr.bf16.gmra.mrb[0].mxu0 %v559
    %v613 = vpop.f32.mrb[0].mxu0
    %v614 = vadd.f32 0.0, %v613
    %v615 = vpop.f32.mrb[0].mxu0
    %v616 = vpop.f32.mrb[0].mxu0
    %v617 = vadd.f32 0.0, %v616
    %v618 = vpop.f32.mrb[0].mxu0
    %619 = vmatprep.mubr.bf16.mxu0 0
    %620 = vmatmul.mubr.bf16.gmra.mrb[0].mxu0 %v562
    %v621 = vpop.f32.mrb[0].mxu0
    %v622 = vadd.f32 0.0, %v621
    %v623 = vpop.f32.mrb[0].mxu0
    %v624 = vpop.f32.mrb[0].mxu0
    %v625 = vadd.f32 0.0, %v624
    %v626 = vpop.f32.mrb[0].mxu0
    %627 = vmatprep.mubr.bf16.mxu0 0
    %628 = vmatmul.mubr.bf16.gmra.mrb[0].mxu0 %v565
    %v629 = vpop.f32.mrb[0].mxu0
    %v630 = vadd.f32 0.0, %v629
    %v631 = vpop.f32.mrb[0].mxu0
    %v632 = vpop.f32.mrb[0].mxu0
    %v633 = vadd.f32 0.0, %v632
    %v634 = vpop.f32.mrb[0].mxu0
    %635 = vdwg.mxu0
    %v636 = vpack.c.bf16 %v609, %v606
    %v637 = vpack.c.bf16 %v617, %v614
    %v638 = vpack.c.bf16 %v625, %v622
    %v639 = vpack.c.bf16 %v633, %v630
    %640 = vrot.lane.b32.xlu0 %v255, 32
    %v641 = vpop.permute.xlu0 %640
    %642 = vrot.lane.b32.xlu0 %v256, 32
    %v643 = vpop.permute.xlu0 %642
    %v647 = vsel %vm259, %v636, 0
    %v650 = vsel %vm259, %v637, 0
    %v653 = vsel %vm259, %v638, 0
    %v656 = vsel %vm259, %v639, 0
    %658 = vmatprep.subr.bf16.mxu0 0
    %659 = vmatpush1.bf16.msra.mxu0 %v641
    %660 = vmatprep.subr.bf16.mxu0 0
    %661 = vmatpush1.bf16.msra.mxu0 %v643
    %662 = vmatprep.subr.bf16.mxu0 0
    %663 = vmatpush1.bf16.msra.mxu0 0
    %664 = vmatprep.subr.bf16.mxu0 0
    %665 = vmatpush1.bf16.msra.mxu0 0
    %666 = vmatprep.subr.bf16.mxu0 0
    %667 = vmatpush1.bf16.msra.mxu0 0
    %668 = vmatprep.subr.bf16.mxu0 0
    %669 = vmatpush1.bf16.msra.mxu0 0
    %670 = vmatprep.subr.bf16.mxu0 0
    %671 = vmatpush1.bf16.msra.mxu0 0
    %672 = vmatprep.subr.bf16.mxu0 0
    %673 = vmatpush1.bf16.msra.mxu0 0
    %674 = vmatprep.subr.bf16.mxu0 0
    %675 = vmatpush1.bf16.msra.mxu0 0
    %676 = vmatprep.subr.bf16.mxu0 0
    %677 = vmatpush1.bf16.msra.mxu0 0
    %678 = vmatprep.subr.bf16.mxu0 0
    %679 = vmatpush1.bf16.msra.mxu0 0
    %680 = vmatprep.subr.bf16.mxu0 0
    %681 = vmatpush1.bf16.msra.mxu0 0
    %682 = vmatprep.subr.bf16.mxu0 0
    %683 = vmatpush1.bf16.msra.mxu0 0
    %684 = vmatprep.subr.bf16.mxu0 0
    %685 = vmatpush1.bf16.msra.mxu0 0
    %686 = vmatprep.subr.bf16.mxu0 0
    %687 = vmatpush1.bf16.msra.mxu0 0
    %688 = vmatprep.subr.bf16.mxu0 0
    %689 = vmatpush1.bf16.msra.mxu0 0
    %690 = vmatprep.mubr.bf16.mxu0 0
    %691 = vmatmul.mubr.bf16.gmra.mrb[0].mxu0 %v647
    %v692 = vpop.f32.mrb[0].mxu0
    %v693 = vadd.f32 0.0, %v692
    %v694 = vpop.f32.mrb[0].mxu0
    %v695 = vpop.f32.mrb[0].mxu0
    %v696 = vadd.f32 0.0, %v695
    %v697 = vpop.f32.mrb[0].mxu0
    %698 = vmatprep.mubr.bf16.mxu0 0
    %699 = vmatmul.mubr.bf16.gmra.mrb[0].mxu0 %v650
    %v700 = vpop.f32.mrb[0].mxu0
    %v701 = vadd.f32 0.0, %v700
    %v702 = vpop.f32.mrb[0].mxu0
    %v703 = vpop.f32.mrb[0].mxu0
    %v704 = vadd.f32 0.0, %v703
    %v705 = vpop.f32.mrb[0].mxu0
    %706 = vmatprep.mubr.bf16.mxu0 0
    %707 = vmatmul.mubr.bf16.gmra.mrb[0].mxu0 %v653
    %v708 = vpop.f32.mrb[0].mxu0
    %v709 = vadd.f32 0.0, %v708
    %v710 = vpop.f32.mrb[0].mxu0
    %v711 = vpop.f32.mrb[0].mxu0
    %v712 = vadd.f32 0.0, %v711
    %v713 = vpop.f32.mrb[0].mxu0
    %714 = vmatprep.mubr.bf16.mxu0 0
    %715 = vmatmul.mubr.bf16.gmra.mrb[0].mxu0 %v656
    %v716 = vpop.f32.mrb[0].mxu0
    %v717 = vadd.f32 0.0, %v716
    %v718 = vpop.f32.mrb[0].mxu0
    %v719 = vpop.f32.mrb[0].mxu0
    %v720 = vadd.f32 0.0, %v719
    %v721 = vpop.f32.mrb[0].mxu0
    %722 = vdwg.mxu0
    %v723 = vadd.f32 %v197, %v693
    %v724 = vadd.f32 %v202, %v696
    %v725 = vadd.f32 %v207, %v701
    %v726 = vadd.f32 %v212, %v704
    %v727 = vadd.f32 %v217, %v709
    %v728 = vadd.f32 %v222, %v712
    %v729 = vadd.f32 %v227, %v717
    %v730 = vadd.f32 %v232, %v720
    %v731 = vld [vmem:[%s4 + $0x2] sm:$0x1]
    %v732 = vld [vmem:[%s4 + $0x3] sm:$0x1]
    %v733 = vsel %vm259, %v723, 0.0
    %734 = vadd.xlane.f32.xlu0 %v733
    %v735 = vpop.xlane.xlu0 %734
    %v736 = vsel %vm259, %v724, 0.0
    %737 = vadd.xlane.f32.xlu0 %v736
    %v738 = vpop.xlane.xlu0 %737
    %v739 = vsel %vm259, %v725, 0.0
    %740 = vadd.xlane.f32.xlu0 %v739
    %v741 = vpop.xlane.xlu0 %740
    %v742 = vsel %vm259, %v726, 0.0
    %743 = vadd.xlane.f32.xlu0 %v742
    %v744 = vpop.xlane.xlu0 %743
    %v745 = vsel %vm259, %v727, 0.0
    %746 = vadd.xlane.f32.xlu0 %v745
    %v747 = vpop.xlane.xlu0 %746
    %v748 = vsel %vm259, %v728, 0.0
    %749 = vadd.xlane.f32.xlu0 %v748
    %v750 = vpop.xlane.xlu0 %749
    %v751 = vsel %vm259, %v729, 0.0
    %752 = vadd.xlane.f32.xlu0 %v751
    %v753 = vpop.xlane.xlu0 %752
    %vm754 = vcmask 254976
    %v755 = vsel %vm754, %v730, 0.0
    %756 = vadd.xlane.f32.xlu0 %v755
    %v757 = vpop.xlane.xlu0 %756
    %v758 = vrcp.pop 32.0
    %v759 = vmul.f32 %v735, %v758
    %v760 = vmul.f32 %v738, %v758
    %v761 = vmul.f32 %v741, %v758
    %v762 = vmul.f32 %v744, %v758
    %v763 = vmul.f32 %v747, %v758
    %v764 = vmul.f32 %v750, %v758
    %v765 = vmul.f32 %v753, %v758
    %v766 = vmul.f32 %v757, %v758
    %v767 = vsub.f32 %v723, %v759
    %v768 = vsub.f32 %v724, %v760
    %v769 = vsub.f32 %v725, %v761
    %v770 = vsub.f32 %v726, %v762
    %v771 = vsub.f32 %v727, %v763
    %v772 = vsub.f32 %v728, %v764
    %v773 = vsub.f32 %v729, %v765
    %v774 = vsub.f32 %v730, %v766
    %v775 = vmul.f32 %v767, %v767
    %v776 = vmul.f32 %v768, %v768
    %v777 = vmul.f32 %v769, %v769
    %v778 = vmul.f32 %v770, %v770
    %v779 = vmul.f32 %v771, %v771
    %v780 = vmul.f32 %v772, %v772
    %v781 = vmul.f32 %v773, %v773
    %v782 = vmul.f32 %v774, %v774
    %v783 = vsel %vm259, %v775, 0.0
    %784 = vadd.xlane.f32.xlu0 %v783
    %v785 = vpop.xlane.xlu0 %784
    %v786 = vsel %vm259, %v776, 0.0
    %787 = vadd.xlane.f32.xlu0 %v786
    %v788 = vpop.xlane.xlu0 %787
    %v789 = vsel %vm259, %v777, 0.0
    %790 = vadd.xlane.f32.xlu0 %v789
    %v791 = vpop.xlane.xlu0 %790
    %v792 = vsel %vm259, %v778, 0.0
    %793 = vadd.xlane.f32.xlu0 %v792
    %v794 = vpop.xlane.xlu0 %793
    %v795 = vsel %vm259, %v779, 0.0
    %796 = vadd.xlane.f32.xlu0 %v795
    %v797 = vpop.xlane.xlu0 %796
    %v798 = vsel %vm259, %v780, 0.0
    %799 = vadd.xlane.f32.xlu0 %v798
    %v800 = vpop.xlane.xlu0 %799
    %v801 = vsel %vm259, %v781, 0.0
    %802 = vadd.xlane.f32.xlu0 %v801
    %v803 = vpop.xlane.xlu0 %802
    %v804 = vsel %vm754, %v782, 0.0
    %805 = vadd.xlane.f32.xlu0 %v804
    %v806 = vpop.xlane.xlu0 %805
    %v807 = vmul.f32 %v785, %v758
    %v808 = vmul.f32 %v788, %v758
    %v809 = vmul.f32 %v791, %v758
    %v810 = vmul.f32 %v794, %v758
    %v811 = vmul.f32 %v797, %v758
    %v812 = vmul.f32 %v800, %v758
    %v813 = vmul.f32 %v803, %v758
    %v814 = vmul.f32 %v806, %v758
    %v815 = vadd.f32 %v807, 1e-05
    %v816 = vadd.f32 %v808, 1e-05
    %v817 = vadd.f32 %v809, 1e-05
    %v818 = vadd.f32 %v810, 1e-05
    %v819 = vadd.f32 %v811, 1e-05
    %v820 = vadd.f32 %v812, 1e-05
    %v821 = vadd.f32 %v813, 1e-05
    %v822 = vadd.f32 %v814, 1e-05
    %v823 = vrsqrt.pop %v815
    %v824 = vrsqrt.pop %v816
    %v825 = vrsqrt.pop %v817
    %v826 = vrsqrt.pop %v818
    %v827 = vrsqrt.pop %v819
    %v828 = vrsqrt.pop %v820
    %v829 = vrsqrt.pop %v821
    %v830 = vrsqrt.pop %v822
    %v831 = vmul.f32 %v767, %v823
    %v832 = vmul.f32 %v768, %v824
    %v833 = vmul.f32 %v769, %v825
    %v834 = vmul.f32 %v770, %v826
    %v835 = vmul.f32 %v771, %v827
    %v836 = vmul.f32 %v772, %v828
    %v837 = vmul.f32 %v773, %v829
    %v838 = vmul.f32 %v774, %v830
    %v839 = vlaneseq
    %v840 = vshrl.u32 %v839, 7
    %v841 = vsub.s32 0, %v840
    %v842 = vrot.slane %v731, %v841
    %v843 = vmul.f32 %v831, %v842
    %v844 = vmul.f32 %v832, %v842
    %v845 = vmul.f32 %v833, %v842
    %v846 = vmul.f32 %v834, %v842
    %v847 = vmul.f32 %v835, %v842
    %v848 = vmul.f32 %v836, %v842
    %v849 = vmul.f32 %v837, %v842
    %v850 = vmul.f32 %v838, %v842
    %v851 = vlaneseq
    %v852 = vshrl.u32 %v851, 7
    %v853 = vsub.s32 0, %v852
    %v854 = vrot.slane %v732, %v853
    %v855 = vadd.f32 %v843, %v854
    %v856 = vadd.f32 %v844, %v854
    %v857 = vadd.f32 %v845, %v854
    %v858 = vadd.f32 %v846, %v854
    %v859 = vadd.f32 %v847, %v854
    %v860 = vadd.f32 %v848, %v854
    %v861 = vadd.f32 %v849, %v854
    %v862 = vadd.f32 %v850, %v854
    %v863 = vpack.c.bf16 %v856, %v855
    %v864 = vpack.c.bf16 %v858, %v857
    %v865 = vpack.c.bf16 %v860, %v859
    %v866 = vpack.c.bf16 %v862, %v861
    %v867 = vld [vmem:[%s4] sm:$0x1]
    %v868 = vlaneseq
    %v869 = vshrl.u32 %v868, 7
    %v870 = vsub.s32 0, %v869
    %v871 = vrot.slane %v867, %v870
    %v876 = vunpack.c.l.b16 %v236
    %v877 = vunpack.c.l.b16 %v238
    %v878 = vunpack.c.l.b16 %v240
    %v879 = vunpack.c.l.b16 %v242
    %v880 = vpack.c.b16 %v877, %v876
    %v881 = vpack.c.b16 %v879, %v878
    %v885 = vsel %vm259, %v863, 0
    %v888 = vsel %vm259, %v864, 0
    %v891 = vsel %vm259, %v865, 0
    %v894 = vsel %vm259, %v866, 0
    %896 = vmatprep.subr.bf16.mxu0 0
    %897 = vmatpush1.bf16.msra.mxu0 %v880
    %898 = vmatprep.subr.bf16.mxu0 0
    %899 = vmatpush1.bf16.msra.mxu0 %v881
    %900 = vmatprep.subr.bf16.mxu0 0
    %901 = vmatpush1.bf16.msra.mxu0 0
    %902 = vmatprep.subr.bf16.mxu0 0
    %903 = vmatpush1.bf16.msra.mxu0 0
    %904 = vmatprep.subr.bf16.mxu0 0
    %905 = vmatpush1.bf16.msra.mxu0 0
    %906 = vmatprep.subr.bf16.mxu0 0
    %907 = vmatpush1.bf16.msra.mxu0 0
    %908 = vmatprep.subr.bf16.mxu0 0
    %909 = vmatpush1.bf16.msra.mxu0 0
    %910 = vmatprep.subr.bf16.mxu0 0
    %911 = vmatpush1.bf16.msra.mxu0 0
    %912 = vmatprep.subr.bf16.mxu0 0
    %913 = vmatpush1.bf16.msra.mxu0 0
    %914 = vmatprep.subr.bf16.mxu0 0
    %915 = vmatpush1.bf16.msra.mxu0 0
    %916 = vmatprep.subr.bf16.mxu0 0
    %917 = vmatpush1.bf16.msra.mxu0 0
    %918 = vmatprep.subr.bf16.mxu0 0
    %919 = vmatpush1.bf16.msra.mxu0 0
    %920 = vmatprep.subr.bf16.mxu0 0
    %921 = vmatpush1.bf16.msra.mxu0 0
    %922 = vmatprep.subr.bf16.mxu0 0
    %923 = vmatpush1.bf16.msra.mxu0 0
    %924 = vmatprep.subr.bf16.mxu0 0
    %925 = vmatpush1.bf16.msra.mxu0 0
    %926 = vmatprep.subr.bf16.mxu0 0
    %927 = vmatpush1.bf16.msra.mxu0 0
    %928 = vmatprep.mubr.bf16.mxu0 0
    %929 = vmatmul.mubr.bf16.gmra.mrb[0].mxu0 %v885
    %v930 = vpop.f32.mrb[0].mxu0
    %v931 = vadd.f32 %v871, %v930
    %v932 = vpop.f32.mrb[0].mxu0
    %v933 = vpop.f32.mrb[0].mxu0
    %v934 = vadd.f32 %v871, %v933
    %v935 = vpop.f32.mrb[0].mxu0
    %936 = vmatprep.mubr.bf16.mxu0 0
    %937 = vmatmul.mubr.bf16.gmra.mrb[0].mxu0 %v888
    %v938 = vpop.f32.mrb[0].mxu0
    %v939 = vadd.f32 %v871, %v938
    %v940 = vpop.f32.mrb[0].mxu0
    %v941 = vpop.f32.mrb[0].mxu0
    %v942 = vadd.f32 %v871, %v941
    %v943 = vpop.f32.mrb[0].mxu0
    %944 = vmatprep.mubr.bf16.mxu0 0
    %945 = vmatmul.mubr.bf16.gmra.mrb[0].mxu0 %v891
    %v946 = vpop.f32.mrb[0].mxu0
    %v947 = vadd.f32 %v871, %v946
    %v948 = vpop.f32.mrb[0].mxu0
    %v949 = vpop.f32.mrb[0].mxu0
    %v950 = vadd.f32 %v871, %v949
    %v951 = vpop.f32.mrb[0].mxu0
    %952 = vmatprep.mubr.bf16.mxu0 0
    %953 = vmatmul.mubr.bf16.gmra.mrb[0].mxu0 %v894
    %v954 = vpop.f32.mrb[0].mxu0
    %v955 = vadd.f32 %v871, %v954
    %v956 = vpop.f32.mrb[0].mxu0
    %v957 = vpop.f32.mrb[0].mxu0
    %v958 = vadd.f32 %v871, %v957
    %v959 = vpop.f32.mrb[0].mxu0
    %960 = vdwg.mxu0
    %v961 = vmul.f32 %v931, 0.5
    %v962 = vmul.f32 %v934, 0.5
    %v963 = vmul.f32 %v939, 0.5
    %v964 = vmul.f32 %v942, 0.5
    %v965 = vmul.f32 %v947, 0.5
    %v966 = vmul.f32 %v950, 0.5
    %v967 = vmul.f32 %v955, 0.5
    %v968 = vmul.f32 %v958, 0.5
    %v969 = vmul.f32 %v931, 0.044715
    %v970 = vmul.f32 %v934, 0.044715
    %v971 = vmul.f32 %v939, 0.044715
    %v972 = vmul.f32 %v942, 0.044715
    %v973 = vmul.f32 %v947, 0.044715
    %v974 = vmul.f32 %v950, 0.044715
    %v975 = vmul.f32 %v955, 0.044715
    %v976 = vmul.f32 %v958, 0.044715
    %v977 = vmul.f32 %v969, %v931
    %v978 = vmul.f32 %v970, %v934
    %v979 = vmul.f32 %v971, %v939
    %v980 = vmul.f32 %v972, %v942
    %v981 = vmul.f32 %v973, %v947
    %v982 = vmul.f32 %v974, %v950
    %v983 = vmul.f32 %v975, %v955
    %v984 = vmul.f32 %v976, %v958
    %v985 = vmul.f32 %v977, %v931
    %v986 = vmul.f32 %v978, %v934
    %v987 = vmul.f32 %v979, %v939
    %v988 = vmul.f32 %v980, %v942
    %v989 = vmul.f32 %v981, %v947
    %v990 = vmul.f32 %v982, %v950
    %v991 = vmul.f32 %v983, %v955
    %v992 = vmul.f32 %v984, %v958
    %v993 = vadd.f32 %v931, %v985
    %v994 = vadd.f32 %v934, %v986
    %v995 = vadd.f32 %v939, %v987
    %v996 = vadd.f32 %v942, %v988
    %v997 = vadd.f32 %v947, %v989
    %v998 = vadd.f32 %v950, %v990
    %v999 = vadd.f32 %v955, %v991
    %v1000 = vadd.f32 %v958, %v992
    %v1001 = vmul.f32 %v993, 0.7978846
    %v1002 = vmul.f32 %v994, 0.7978846
    %v1003 = vmul.f32 %v995, 0.7978846
    %v1004 = vmul.f32 %v996, 0.7978846
    %v1005 = vmul.f32 %v997, 0.7978846
    %v1006 = vmul.f32 %v998, 0.7978846
    %v1007 = vmul.f32 %v999, 0.7978846
    %v1008 = vmul.f32 %v1000, 0.7978846
    %v1009 = vtanh.pop %v1001
    %v1010 = vtanh.pop %v1002
    %v1011 = vtanh.pop %v1003
    %v1012 = vtanh.pop %v1004
    %v1013 = vtanh.pop %v1005
    %v1014 = vtanh.pop %v1006
    %v1015 = vtanh.pop %v1007
    %v1016 = vtanh.pop %v1008
    %v1017 = vadd.f32 %v1009, 1.0
    %v1018 = vadd.f32 %v1010, 1.0
    %v1019 = vadd.f32 %v1011, 1.0
    %v1020 = vadd.f32 %v1012, 1.0
    %v1021 = vadd.f32 %v1013, 1.0
    %v1022 = vadd.f32 %v1014, 1.0
    %v1023 = vadd.f32 %v1015, 1.0
    %v1024 = vadd.f32 %v1016, 1.0
    %v1025 = vmul.f32 %v961, %v1017
    %v1026 = vmul.f32 %v962, %v1018
    %v1027 = vmul.f32 %v963, %v1019
    %v1028 = vmul.f32 %v964, %v1020
    %v1029 = vmul.f32 %v965, %v1021
    %v1030 = vmul.f32 %v966, %v1022
    %v1031 = vmul.f32 %v967, %v1023
    %v1032 = vmul.f32 %v968, %v1024
    %v1033 = vpack.c.bf16 %v1026, %v1025
    %v1034 = vpack.c.bf16 %v1028, %v1027
    %v1035 = vpack.c.bf16 %v1030, %v1029
    %v1036 = vpack.c.bf16 %v1032, %v1031
    %v1037 = vld [vmem:[%s3] sm:$0xf]
    %v1038 = vld [vmem:[%s3 + $0x4] sm:$0xf]
    %v1039 = vld [vmem:[%s3 + $0x8] sm:$0xf]
    %v1040 = vld [vmem:[%s3 + $0xc] sm:$0xf]
    %v1041 = vld [vmem:[%s3 + $0x10] sm:$0xf]
    %v1042 = vld [vmem:[%s3 + $0x14] sm:$0xf]
    %v1043 = vld [vmem:[%s3 + $0x18] sm:$0xf]
    %v1044 = vld [vmem:[%s3 + $0x1c] sm:$0xf]
    %v1045 = vld [vmem:[%s4 + $0x1] sm:$0x1]
    %v1046 = vlaneseq
    %v1047 = vshrl.u32 %v1046, 7
    %v1048 = vsub.s32 0, %v1047
    %v1049 = vrot.slane %v1045, %v1048
    %v1058 = vunpack.c.l.b16 %v1037
    %v1059 = vunpack.c.l.b16 %v1038
    %v1060 = vunpack.c.l.b16 %v1039
    %v1061 = vunpack.c.l.b16 %v1040
    %v1062 = vunpack.c.l.b16 %v1041
    %v1063 = vunpack.c.l.b16 %v1042
    %v1064 = vunpack.c.l.b16 %v1043
    %v1065 = vunpack.c.l.b16 %v1044
    %v1066 = vpack.c.b16 %v1059, %v1058
    %v1067 = vpack.c.b16 %v1061, %v1060
    %v1068 = vpack.c.b16 %v1063, %v1062
    %v1069 = vpack.c.b16 %v1065, %v1064
    %vm1074 = vcmask 523264
    %v1076 = vsel %vm1074, %v1033, 0
    %v1079 = vsel %vm1074, %v1034, 0
    %v1082 = vsel %vm1074, %v1035, 0
    %v1085 = vsel %vm1074, %v1036, 0
    %1087 = vmatprep.subr.bf16.mxu0 0
    %1088 = vmatpush1.bf16.msra.mxu0 %v1066
    %1089 = vmatprep.subr.bf16.mxu0 0
    %1090 = vmatpush1.bf16.msra.mxu0 %v1067
    %1091 = vmatprep.subr.bf16.mxu0 0
    %1092 = vmatpush1.bf16.msra.mxu0 %v1068
    %1093 = vmatprep.subr.bf16.mxu0 0
    %1094 = vmatpush1.bf16.msra.mxu0 %v1069
    %1095 = vmatprep.subr.bf16.mxu0 0
    %1096 = vmatpush1.bf16.msra.mxu0 0
    %1097 = vmatprep.subr.bf16.mxu0 0
    %1098 = vmatpush1.bf16.msra.mxu0 0
    %1099 = vmatprep.subr.bf16.mxu0 0
    %1100 = vmatpush1.bf16.msra.mxu0 0
    %1101 = vmatprep.subr.bf16.mxu0 0
    %1102 = vmatpush1.bf16.msra.mxu0 0
    %1103 = vmatprep.subr.bf16.mxu0 0
    %1104 = vmatpush1.bf16.msra.mxu0 0
    %1105 = vmatprep.subr.bf16.mxu0 0
    %1106 = vmatpush1.bf16.msra.mxu0 0
    %1107 = vmatprep.subr.bf16.mxu0 0
    %1108 = vmatpush1.bf16.msra.mxu0 0
    %1109 = vmatprep.subr.bf16.mxu0 0
    %1110 = vmatpush1.bf16.msra.mxu0 0
    %1111 = vmatprep.subr.bf16.mxu0 0
    %1112 = vmatpush1.bf16.msra.mxu0 0
    %1113 = vmatprep.subr.bf16.mxu0 0
    %1114 = vmatpush1.bf16.msra.mxu0 0
    %1115 = vmatprep.subr.bf16.mxu0 0
    %1116 = vmatpush1.bf16.msra.mxu0 0
    %1117 = vmatprep.subr.bf16.mxu0 0
    %1118 = vmatpush1.bf16.msra.mxu0 0
    %1119 = vmatprep.mubr.bf16.mxu0 0
    %1120 = vmatmul.mubr.bf16.gmra.mrb[0].mxu0 %v1076
    %v1121 = vpop.f32.mrb[0].mxu0
    %v1122 = vadd.f32 %v1049, %v1121
    %v1123 = vpop.f32.mrb[0].mxu0
    %v1124 = vpop.f32.mrb[0].mxu0
    %v1125 = vadd.f32 %v1049, %v1124
    %v1126 = vpop.f32.mrb[0].mxu0
    %1127 = vmatprep.mubr.bf16.mxu0 0
    %1128 = vmatmul.mubr.bf16.gmra.mrb[0].mxu0 %v1079
    %v1129 = vpop.f32.mrb[0].mxu0
    %v1130 = vadd.f32 %v1049, %v1129
    %v1131 = vpop.f32.mrb[0].mxu0
    %v1132 = vpop.f32.mrb[0].mxu0
    %v1133 = vadd.f32 %v1049, %v1132
    %v1134 = vpop.f32.mrb[0].mxu0
    %1135 = vmatprep.mubr.bf16.mxu0 0
    %1136 = vmatmul.mubr.bf16.gmra.mrb[0].mxu0 %v1082
    %v1137 = vpop.f32.mrb[0].mxu0
    %v1138 = vadd.f32 %v1049, %v1137
    %v1139 = vpop.f32.mrb[0].mxu0
    %v1140 = vpop.f32.mrb[0].mxu0
    %v1141 = vadd.f32 %v1049, %v1140
    %v1142 = vpop.f32.mrb[0].mxu0
    %1143 = vmatprep.mubr.bf16.mxu0 0
    %1144 = vmatmul.mubr.bf16.gmra.mrb[0].mxu0 %v1085
    %v1145 = vpop.f32.mrb[0].mxu0
    %v1146 = vadd.f32 %v1049, %v1145
    %v1147 = vpop.f32.mrb[0].mxu0
    %v1148 = vpop.f32.mrb[0].mxu0
    %v1149 = vadd.f32 %v1049, %v1148
    %v1150 = vpop.f32.mrb[0].mxu0
    %1151 = vdwg.mxu0
    %v1152 = vadd.f32 %v855, %v1122
    %v1153 = vadd.f32 %v856, %v1125
    %v1154 = vadd.f32 %v857, %v1130
    %v1155 = vadd.f32 %v858, %v1133
    %v1156 = vadd.f32 %v859, %v1138
    %v1157 = vadd.f32 %v860, %v1141
    %v1158 = vadd.f32 %v861, %v1146
    %v1159 = vadd.f32 %v862, %v1149
    %v1160 = vld [vmem:[%s4 + $0x4] sm:$0x1]
    %v1161 = vld [vmem:[%s4 + $0x5] sm:$0x1]
    %v1162 = vsel %vm259, %v1152, 0.0
    %1163 = vadd.xlane.f32.xlu0 %v1162
    %v1164 = vpop.xlane.xlu0 %1163
    %v1165 = vsel %vm259, %v1153, 0.0
    %1166 = vadd.xlane.f32.xlu0 %v1165
    %v1167 = vpop.xlane.xlu0 %1166
    %v1168 = vsel %vm259, %v1154, 0.0
    %1169 = vadd.xlane.f32.xlu0 %v1168
    %v1170 = vpop.xlane.xlu0 %1169
    %v1171 = vsel %vm259, %v1155, 0.0
    %1172 = vadd.xlane.f32.xlu0 %v1171
    %v1173 = vpop.xlane.xlu0 %1172
    %v1174 = vsel %vm259, %v1156, 0.0
    %1175 = vadd.xlane.f32.xlu0 %v1174
    %v1176 = vpop.xlane.xlu0 %1175
    %v1177 = vsel %vm259, %v1157, 0.0
    %1178 = vadd.xlane.f32.xlu0 %v1177
    %v1179 = vpop.xlane.xlu0 %1178
    %v1180 = vsel %vm259, %v1158, 0.0
    %1181 = vadd.xlane.f32.xlu0 %v1180
    %v1182 = vpop.xlane.xlu0 %1181
    %v1183 = vsel %vm754, %v1159, 0.0
    %1184 = vadd.xlane.f32.xlu0 %v1183
    %v1185 = vpop.xlane.xlu0 %1184
    %v1186 = vmul.f32 %v1164, %v758
    %v1187 = vmul.f32 %v1167, %v758
    %v1188 = vmul.f32 %v1170, %v758
    %v1189 = vmul.f32 %v1173, %v758
    %v1190 = vmul.f32 %v1176, %v758
    %v1191 = vmul.f32 %v1179, %v758
    %v1192 = vmul.f32 %v1182, %v758
    %v1193 = vmul.f32 %v1185, %v758
    %v1194 = vsub.f32 %v1152, %v1186
    %v1195 = vsub.f32 %v1153, %v1187
    %v1196 = vsub.f32 %v1154, %v1188
    %v1197 = vsub.f32 %v1155, %v1189
    %v1198 = vsub.f32 %v1156, %v1190
    %v1199 = vsub.f32 %v1157, %v1191
    %v1200 = vsub.f32 %v1158, %v1192
    %v1201 = vsub.f32 %v1159, %v1193
    %v1202 = vmul.f32 %v1194, %v1194
    %v1203 = vmul.f32 %v1195, %v1195
    %v1204 = vmul.f32 %v1196, %v1196
    %v1205 = vmul.f32 %v1197, %v1197
    %v1206 = vmul.f32 %v1198, %v1198
    %v1207 = vmul.f32 %v1199, %v1199
    %v1208 = vmul.f32 %v1200, %v1200
    %v1209 = vmul.f32 %v1201, %v1201
    %v1210 = vsel %vm259, %v1202, 0.0
    %1211 = vadd.xlane.f32.xlu0 %v1210
    %v1212 = vpop.xlane.xlu0 %1211
    %v1213 = vsel %vm259, %v1203, 0.0
    %1214 = vadd.xlane.f32.xlu0 %v1213
    %v1215 = vpop.xlane.xlu0 %1214
    %v1216 = vsel %vm259, %v1204, 0.0
    %1217 = vadd.xlane.f32.xlu0 %v1216
    %v1218 = vpop.xlane.xlu0 %1217
    %v1219 = vsel %vm259, %v1205, 0.0
    %1220 = vadd.xlane.f32.xlu0 %v1219
    %v1221 = vpop.xlane.xlu0 %1220
    %v1222 = vsel %vm259, %v1206, 0.0
    %1223 = vadd.xlane.f32.xlu0 %v1222
    %v1224 = vpop.xlane.xlu0 %1223
    %v1225 = vsel %vm259, %v1207, 0.0
    %1226 = vadd.xlane.f32.xlu0 %v1225
    %v1227 = vpop.xlane.xlu0 %1226
    %v1228 = vsel %vm259, %v1208, 0.0
    %1229 = vadd.xlane.f32.xlu0 %v1228
    %v1230 = vpop.xlane.xlu0 %1229
    %v1231 = vsel %vm754, %v1209, 0.0
    %1232 = vadd.xlane.f32.xlu0 %v1231
    %v1233 = vpop.xlane.xlu0 %1232
    %v1234 = vmul.f32 %v1212, %v758
    %v1235 = vmul.f32 %v1215, %v758
    %v1236 = vmul.f32 %v1218, %v758
    %v1237 = vmul.f32 %v1221, %v758
    %v1238 = vmul.f32 %v1224, %v758
    %v1239 = vmul.f32 %v1227, %v758
    %v1240 = vmul.f32 %v1230, %v758
    %v1241 = vmul.f32 %v1233, %v758
    %v1242 = vadd.f32 %v1234, 1e-05
    %v1243 = vadd.f32 %v1235, 1e-05
    %v1244 = vadd.f32 %v1236, 1e-05
    %v1245 = vadd.f32 %v1237, 1e-05
    %v1246 = vadd.f32 %v1238, 1e-05
    %v1247 = vadd.f32 %v1239, 1e-05
    %v1248 = vadd.f32 %v1240, 1e-05
    %v1249 = vadd.f32 %v1241, 1e-05
    %v1250 = vrsqrt.pop %v1242
    %v1251 = vrsqrt.pop %v1243
    %v1252 = vrsqrt.pop %v1244
    %v1253 = vrsqrt.pop %v1245
    %v1254 = vrsqrt.pop %v1246
    %v1255 = vrsqrt.pop %v1247
    %v1256 = vrsqrt.pop %v1248
    %v1257 = vrsqrt.pop %v1249
    %v1258 = vmul.f32 %v1194, %v1250
    %v1259 = vmul.f32 %v1195, %v1251
    %v1260 = vmul.f32 %v1196, %v1252
    %v1261 = vmul.f32 %v1197, %v1253
    %v1262 = vmul.f32 %v1198, %v1254
    %v1263 = vmul.f32 %v1199, %v1255
    %v1264 = vmul.f32 %v1200, %v1256
    %v1265 = vmul.f32 %v1201, %v1257
    %v1266 = vlaneseq
    %v1267 = vshrl.u32 %v1266, 7
    %v1268 = vsub.s32 0, %v1267
    %v1269 = vrot.slane %v1160, %v1268
    %v1270 = vmul.f32 %v1258, %v1269
    %v1271 = vmul.f32 %v1259, %v1269
    %v1272 = vmul.f32 %v1260, %v1269
    %v1273 = vmul.f32 %v1261, %v1269
    %v1274 = vmul.f32 %v1262, %v1269
    %v1275 = vmul.f32 %v1263, %v1269
    %v1276 = vmul.f32 %v1264, %v1269
    %v1277 = vmul.f32 %v1265, %v1269
    %v1278 = vlaneseq
    %v1279 = vshrl.u32 %v1278, 7
    %v1280 = vsub.s32 0, %v1279
    %v1281 = vrot.slane %v1161, %v1280
    %v1282 = vadd.f32 %v1270, %v1281
    %v1283 = vadd.f32 %v1271, %v1281
    %v1284 = vadd.f32 %v1272, %v1281
    %v1285 = vadd.f32 %v1273, %v1281
    %v1286 = vadd.f32 %v1274, %v1281
    %v1287 = vadd.f32 %v1275, %v1281
    %v1288 = vadd.f32 %v1276, %v1281
    %v1289 = vadd.f32 %v1277, %v1281
    %v1290 = vpack.c.bf16 %v1283, %v1282
    %v1291 = vpack.c.bf16 %v1285, %v1284
    %v1292 = vpack.c.bf16 %v1287, %v1286
    %v1293 = vpack.c.bf16 %v1289, %v1288
    %v1294 = vld [vmem:[%s4 + $0x6] sm:$0x1]
    %v1295 = vlaneseq
    %v1296 = vshrl.u32 %v1295, 7
    %v1297 = vsub.s32 0, %v1296
    %v1298 = vrot.slane %v1294, %v1297
    %v1299 = vunpack.c.h.b16 %v235
    %v1300 = vunpack.c.h.b16 %v237
    %v1301 = vunpack.c.h.b16 %v239
    %v1302 = vunpack.c.h.b16 %v241
    %v1303 = vpack.c.b16 %v1300, %v1299
    %v1304 = vpack.c.b16 %v1302, %v1301
    %v1308 = vsel %vm259, %v1290, 0
    %v1311 = vsel %vm259, %v1291, 0
    %v1314 = vsel %vm259, %v1292, 0
    %v1317 = vsel %vm259, %v1293, 0
    %1319 = vmatprep.subr.bf16.mxu0 0
    %1320 = vmatpush1.bf16.msra.mxu0 %v1303
    %1321 = vmatprep.subr.bf16.mxu0 0
    %1322 = vmatpush1.bf16.msra.mxu0 %v1304
    %1323 = vmatprep.subr.bf16.mxu0 0
    %1324 = vmatpush1.bf16.msra.mxu0 0
    %1325 = vmatprep.subr.bf16.mxu0 0
    %1326 = vmatpush1.bf16.msra.mxu0 0
    %1327 = vmatprep.subr.bf16.mxu0 0
    %1328 = vmatpush1.bf16.msra.mxu0 0
    %1329 = vmatprep.subr.bf16.mxu0 0
    %1330 = vmatpush1.bf16.msra.mxu0 0
    %1331 = vmatprep.subr.bf16.mxu0 0
    %1332 = vmatpush1.bf16.msra.mxu0 0
    %1333 = vmatprep.subr.bf16.mxu0 0
    %1334 = vmatpush1.bf16.msra.mxu0 0
    %1335 = vmatprep.subr.bf16.mxu0 0
    %1336 = vmatpush1.bf16.msra.mxu0 0
    %1337 = vmatprep.subr.bf16.mxu0 0
    %1338 = vmatpush1.bf16.msra.mxu0 0
    %1339 = vmatprep.subr.bf16.mxu0 0
    %1340 = vmatpush1.bf16.msra.mxu0 0
    %1341 = vmatprep.subr.bf16.mxu0 0
    %1342 = vmatpush1.bf16.msra.mxu0 0
    %1343 = vmatprep.subr.bf16.mxu0 0
    %1344 = vmatpush1.bf16.msra.mxu0 0
    %1345 = vmatprep.subr.bf16.mxu0 0
    %1346 = vmatpush1.bf16.msra.mxu0 0
    %1347 = vmatprep.subr.bf16.mxu0 0
    %1348 = vmatpush1.bf16.msra.mxu0 0
    %1349 = vmatprep.subr.bf16.mxu0 0
    %1350 = vmatpush1.bf16.msra.mxu0 0
    %1351 = vmatprep.mubr.bf16.mxu0 0
    %1352 = vmatmul.mubr.bf16.gmra.mrb[0].mxu0 %v1308
    %v1353 = vpop.f32.mrb[0].mxu0
    %v1354 = vadd.f32 %v1298, %v1353
    %v1355 = vpop.f32.mrb[0].mxu0
    %v1356 = vpop.f32.mrb[0].mxu0
    %v1357 = vadd.f32 %v1298, %v1356
    %v1358 = vpop.f32.mrb[0].mxu0
    %1359 = vmatprep.mubr.bf16.mxu0 0
    %1360 = vmatmul.mubr.bf16.gmra.mrb[0].mxu0 %v1311
    %v1361 = vpop.f32.mrb[0].mxu0
    %v1362 = vadd.f32 %v1298, %v1361
    %v1363 = vpop.f32.mrb[0].mxu0
    %v1364 = vpop.f32.mrb[0].mxu0
    %v1365 = vadd.f32 %v1298, %v1364
    %v1366 = vpop.f32.mrb[0].mxu0
    %1367 = vmatprep.mubr.bf16.mxu0 0
    %1368 = vmatmul.mubr.bf16.gmra.mrb[0].mxu0 %v1314
    %v1369 = vpop.f32.mrb[0].mxu0
    %v1370 = vadd.f32 %v1298, %v1369
    %v1371 = vpop.f32.mrb[0].mxu0
    %v1372 = vpop.f32.mrb[0].mxu0
    %v1373 = vadd.f32 %v1298, %v1372
    %v1374 = vpop.f32.mrb[0].mxu0
    %1375 = vmatprep.mubr.bf16.mxu0 0
    %1376 = vmatmul.mubr.bf16.gmra.mrb[0].mxu0 %v1317
    %v1377 = vpop.f32.mrb[0].mxu0
    %v1378 = vadd.f32 %v1298, %v1377
    %v1379 = vpop.f32.mrb[0].mxu0
    %v1380 = vpop.f32.mrb[0].mxu0
    %v1381 = vadd.f32 %v1298, %v1380
    %v1382 = vpop.f32.mrb[0].mxu0
    %1383 = vdwg.mxu0
    %1384 = vst [vmem:[#allocation5] sm:$0xff] %v1354
    %1385 = vst [vmem:[#allocation5 + $0x8] sm:$0xff] %v1357
    %1386 = vst [vmem:[#allocation5 + $0x10] sm:$0xff] %v1362
    %1387 = vst [vmem:[#allocation5 + $0x18] sm:$0xff] %v1365
    %1388 = vst [vmem:[#allocation5 + $0x20] sm:$0xff] %v1370
    %1389 = vst [vmem:[#allocation5 + $0x28] sm:$0xff] %v1373
    %1390 = vst [vmem:[#allocation5 + $0x30] sm:$0xff] %v1378
    %1391 = vst [vmem:[#allocation5 + $0x38] sm:$0x3] %v1381
    // Predicated region
    $region30: #{tpu_custom_call.1} parent=1 // pred_check
      _
    $region31: #{tpu_custom_call.1} parent=1 // pred_check_branch
      %1393 = sbr.rel (0) target = $region33
    $region32: #{tpu_custom_call.1} parent=1 // pred_region
      %s1395 = ssub.s32 1024, 1024
      %1396 = vsyncadd [#allocation4], %s1395
      %s1397 = sshll.u32 [#allocation5], 4
      %s1398 = int_to_ptr.vmem [resolvable:$true] %s1397
      %1403 = dma.vmem_to_hbm [thread:$0]  %s1398, 1024, %s6, [#allocation4], 128, 128, 8
    $region33: #{tpu_custom_call.1} parent=1 // pred_fallthru
      _
    // Predicated region
    $region34: #{tpu_custom_call.1} parent=1 // pred_check
      _
    $region35: #{tpu_custom_call.1} parent=1 // pred_check_branch
      %1405 = sbr.rel (0) target = $region37
    $region36: #{tpu_custom_call.1} parent=1 // pred_region
      %1406 = dma.done [#allocation4], 1024
    $region37: #{tpu_custom_call.1} parent=1 // pred_fallthru
      _
    %1407 = vsyncpa [#allocation3], 1
    %1408 = vsyncpa [#allocation4], 1

</llo_original>
